<compile_context>
chip_gen: v7x
topology: tpu7x:2x2x1
jax: 0.10.0
libtpu: 0.0.40
codegen_flags: <defaults>
</compile_context>

<pallas_src>
from functools import partial

import jax
import jax.numpy as jnp
from jax.experimental import pallas as pl
from jax.experimental.pallas import tpu as pltpu


# --------------------------------------------------------------------------- #
# Fused SepConv (stride-1 "same" geometry):                                    #
#   pre-affine -> ReLU -> depthwise KxK -> 1x1 -> per-image BN partial sums    #
# --------------------------------------------------------------------------- #
def _fused_sep_conv(x, pre_scale, pre_shift, dw_w, pw_w, *, padding, dilation):
    """One fused SepConv pass (everything except the final BN apply).

    x:         (N, C_in, H, W) float32 (NCHW, PyTorch layout)
    pre_scale: (C_in,) per-channel scale applied before the ReLU
               (folded BN of the previous block; ones = identity)
    pre_shift: (C_in,) per-channel shift applied before the ReLU
    dw_w:      (K, K, C_in) depthwise weights (channel c convolves channel c)
    pw_w:      (C_in, C_out) 1x1 weights (bias dropped: a constant per-channel
               bias only shifts the batch mean, so it cancels under BN)

    Requires stride == 1 and 2*padding == (K-1)*dilation (output size == input
    size), which is how SepConv is configured in xautodl normal cells.
    Returns (y, mean, var): y is the pre-BN output (N, C_out, H, W); mean/var
    are the biased (training-mode) batch statistics of y.
    """
    N, C_in, H, W = x.shape
    K = dw_w.shape[0]
    C_out = pw_w.shape[1]
    S = H * W
    Z = padding * W + padding          # flat zero-guard length on each side

    # tiny host-side repacks (free / negligible)
    dw_cm = jnp.transpose(dw_w, (2, 0, 1)).reshape(C_in, K * K)   # (C_in, K*K)
    pw_t = jnp.transpose(pw_w)                                    # (C_out, C_in)
    x_flat = x.reshape(N, C_in, S)

    def kernel(sc_ref, sh_ref, dw_ref, pwt_ref, x_ref, y_ref, ssum_ref, ssq_ref):
        # ---- folded prev-BN affine + ReLU, lane-dense (C_in, S) -------------
        a = jnp.maximum(x_ref[0] * sc_ref[...] + sh_ref[...], 0.0)

        # ---- zero guard built once in registers (no scratch round trip) -----
        if Z > 0:
            zpad = jnp.zeros((C_in, Z), jnp.float32)
            a = jnp.concatenate([zpad, a, zpad], axis=1)          # (C_in, S+2Z)

        # Column-validity masks.  Only taps with a horizontal offset need one:
        # vertical out-of-range reads always land in the zero guard (or are
        # already excluded by the column mask), so no row masks are required.
        col = None
        col_mask = {}
        for kw in range(K):
            dc = kw * dilation - padding
            if dc != 0 and dc not in col_mask:
                if col is None:
                    col = jax.lax.broadcasted_iota(jnp.int32, (1, S), 1) % W
                col_mask[dc] = (col >= -dc) if dc < 0 else (col < W - dc)

        # ---- depthwise KxK: one lane-dense FMA per tap, all channels at once
        z = jnp.zeros((C_in, S), jnp.float32)
        for kh in range(K):
            for kw in range(K):
                dc = kw * dilation - padding
                off = kh * dilation * W + kw * dilation           # >= 0
                tap = a[:, off:off + S]                           # (C_in, S)
                if dc != 0:
                    tap = jnp.where(col_mask[dc], tap, 0.0)
                t = kh * K + kw
                z = z + tap * dw_ref[:, t:t + 1]                  # (C_in,1) bcast

        # ---- 1x1 pointwise: one contraction, weights in VMEM ----------------
        y = jnp.dot(pwt_ref[...], z, preferred_element_type=jnp.float32)  # (C_out,S)
        y_ref[0] = y                                              # lane-dense store

        # ---- per-image BN partials, fully reduced over H*W in-kernel --------
        ssum_ref[0] = jnp.sum(y, axis=1, keepdims=True)           # (C_out, 1)
        ssq_ref[0] = jnp.sum(y * y, axis=1, keepdims=True)

    y, ssum, ssq = pl.pallas_call(
        kernel,
        out_shape=(
            jax.ShapeDtypeStruct((N, C_out, S), jnp.float32),     # pre-BN y (flat)
            jax.ShapeDtypeStruct((N, C_out, 1), jnp.float32),     # partial sum
            jax.ShapeDtypeStruct((N, C_out, 1), jnp.float32),     # partial sumsq
        ),
        grid=(N,),
        in_specs=[
            pl.BlockSpec((C_in, 1), lambda n: (0, 0)),            # pre_scale
            pl.BlockSpec((C_in, 1), lambda n: (0, 0)),            # pre_shift
            pl.BlockSpec((C_in, K * K), lambda n: (0, 0)),        # depthwise taps
            pl.BlockSpec((C_out, C_in), lambda n: (0, 0)),        # 1x1 weights (T)
            pl.BlockSpec((1, C_in, S), lambda n: (n, 0, 0)),      # x (flat, per image)
        ],
        out_specs=(
            pl.BlockSpec((1, C_out, S), lambda n: (n, 0, 0)),
            pl.BlockSpec((1, C_out, 1), lambda n: (n, 0, 0)),
            pl.BlockSpec((1, C_out, 1), lambda n: (n, 0, 0)),
        ),
        compiler_params=pltpu.CompilerParams(
            dimension_semantics=("parallel",)),
    )(pre_scale.reshape(C_in, 1), pre_shift.reshape(C_in, 1),
      dw_cm, pw_t, x_flat)

    m = N * S
    mean = jnp.sum(ssum, axis=(0, 2)) / m
    # Biased variance (PyTorch BN training mode).  E[y^2]-E[y]^2 is fine at
    # these magnitudes; TODO(synk): centered partial sums if used at scale.
    var = jnp.sum(ssq, axis=(0, 2)) / m - mean * mean
    return y.reshape(N, C_out, H, W), mean, var


# --------------------------------------------------------------------------- #
# General-geometry fallback (stride != 1 or non-"same" padding): XLA convs     #
# --------------------------------------------------------------------------- #
def _xla_sep_conv(x, pre_scale, pre_shift, dw_w, pw_w, *, stride, padding, dilation):
    # TODO(synk): geometries outside the stride-1 "same" fast path (e.g. the
    # stride-2 reduction-cell variant) use XLA convs here; a halo-tiled Pallas
    # path would replace this for large spatial extents.
    N, C_in, H, W = x.shape
    K = dw_w.shape[0]
    a = jnp.maximum(
        x * pre_scale[None, :, None, None] + pre_shift[None, :, None, None], 0.0)
    z = jax.lax.conv_general_dilated(
        a, dw_w.reshape(K, K, 1, C_in), (stride, stride),
        [(padding, padding), (padding, padding)],
        rhs_dilation=(dilation, dilation),
        dimension_numbers=("NCHW", "HWIO", "NCHW"),
        feature_group_count=C_in)
    y = jnp.einsum("nchw,cd->ndhw", z, pw_w)
    return y, y.mean(axis=(0, 2, 3)), y.var(axis=(0, 2, 3))


def _sep_conv(x, pre_scale, pre_shift, dw_w, pw_w, *, stride, padding, dilation):
    N, C_in, H, W = x.shape
    K = dw_w.shape[0]
    eff = (K - 1) * dilation + 1
    Ho = (H + 2 * padding - eff) // stride + 1
    Wo = (W + 2 * padding - eff) // stride + 1
    if stride == 1 and Ho == H and Wo == W:
        return _fused_sep_conv(x, pre_scale, pre_shift, dw_w, pw_w,
                               padding=padding, dilation=dilation)
    return _xla_sep_conv(x, pre_scale, pre_shift, dw_w, pw_w,
                         stride=stride, padding=padding, dilation=dilation)


# --------------------------------------------------------------------------- #
# Final BN apply: lane-dense per-channel affine, written in place              #
# --------------------------------------------------------------------------- #
def _bn_apply(y_flat, scale, shift):
    """y*scale + shift per channel on (N, C, P); P is the lane axis."""
    N, C, P = y_flat.shape

    def kernel(y_ref, sc_ref, sh_ref, o_ref):
        # (C, 1) scale/shift broadcast along lanes -> one vector FMA per block.
        # (SMEM scalars would need C splats; the 2*C*4-byte VMEM fetch per step
        #  is cheaper than that at these channel counts.)
        o_ref[0] = y_ref[0] * sc_ref[...] + sh_ref[...]

    return pl.pallas_call(
        kernel,
        out_shape=jax.ShapeDtypeStruct((N, C, P), jnp.float32),
        grid=(N,),
        in_specs=[
            pl.BlockSpec((1, C, P), lambda n: (n, 0, 0)),
            pl.BlockSpec((C, 1), lambda n: (0, 0)),
            pl.BlockSpec((C, 1), lambda n: (0, 0)),
        ],
        out_specs=pl.BlockSpec((1, C, P), lambda n: (n, 0, 0)),
        input_output_aliases={0: 0},          # write the affine in place
        compiler_params=pltpu.CompilerParams(
            dimension_semantics=("parallel",)),
    )(y_flat, scale.reshape(C, 1), shift.reshape(C, 1))


# --------------------------------------------------------------------------- #
# DualSepConv                                                                  #
# --------------------------------------------------------------------------- #
@partial(jax.jit, static_argnames=("stride", "padding", "dilation"))
def dual_sep_conv(x_nchw, params_a, params_b, *, stride, padding, dilation,
                  eps=1e-5):
    """DualSepConv forward. x_nchw: (N, C_in, H, W) float32 (PyTorch layout)."""
    N, C_in, H, W = x_nchw.shape
    dw_a, pw_a, _bias_a, gamma_a, beta_a = params_a   # 1x1 bias cancels under BN
    dw_b, pw_b, _bias_b, gamma_b, beta_b = params_b

    # SepConv A (C_in -> C_in, stride): identity pre-affine (plain ReLU on x).
    y_a, mean_a, var_a = _sep_conv(
        x_nchw, jnp.ones((C_in,), jnp.float32), jnp.zeros((C_in,), jnp.float32),
        dw_a, pw_a, stride=stride, padding=padding, dilation=dilation)
    scale_a = gamma_a / jnp.sqrt(var_a + eps)
    shift_a = beta_a - mean_a * scale_a

    # SepConv B (C_in -> C_out, stride 1): BN_A is folded into B's pre-ReLU
    # affine, so y_a never makes a separate normalization pass through HBM.
    y_b, mean_b, var_b = _sep_conv(
        y_a, scale_a, shift_a, dw_b, pw_b,
        stride=1, padding=padding, dilation=dilation)
    scale_b = gamma_b / jnp.sqrt(var_b + eps)
    shift_b = beta_b - mean_b * scale_b

    # Final BN apply of block B on a lane-dense (N, C_out, Ho*Wo) view.
    Nb, C_out, Ho, Wo = y_b.shape
    out = _bn_apply(y_b.reshape(Nb, C_out, Ho * Wo), scale_b, shift_b)
    # TODO(synk): running_mean/running_var updates (track_running_stats) are
    # training-state bookkeeping and do not affect the forward output; omitted.
    return out.reshape(Nb, C_out, Ho, Wo)


# ----------------------------- pure-JAX reference --------------------------- #
def _ref_sep_conv(x_nhwc, dw_w, pw_w, pw_b, gamma, beta, *,
                  stride, padding, dilation, eps=1e-5):
    K = dw_w.shape[0]
    C_in = x_nhwc.shape[-1]
    x = jnp.maximum(x_nhwc, 0.0)
    dw = dw_w.reshape(K, K, 1, C_in)                              # HWIO, grouped
    z = jax.lax.conv_general_dilated(
        x, dw, (stride, stride),
        [(padding, padding), (padding, padding)],
        rhs_dilation=(dilation, dilation),
        dimension_numbers=("NHWC", "HWIO", "NHWC"),
        feature_group_count=C_in)
    y = jnp.einsum("nhwc,cd->nhwd", z, pw_w) + pw_b
    mean = y.mean(axis=(0, 1, 2))
    var = y.var(axis=(0, 1, 2))
    return (y - mean) / jnp.sqrt(var + eps) * gamma + beta


def _ref_dual(x_nchw, params_a, params_b, *, stride, padding, dilation):
    x = jnp.transpose(x_nchw, (0, 2, 3, 1))
    x = _ref_sep_conv(x, *params_a, stride=stride, padding=padding,
                      dilation=dilation)
    x = _ref_sep_conv(x, *params_b, stride=1, padding=padding,
                      dilation=dilation)
    return jnp.transpose(x, (0, 3, 1, 2))


if __name__ == "__main__":
    # DualSepConv(C_in=8, C_out=16, kernel_size=3, stride=1, padding=1,
    #             dilation=1, affine=True)
    N, C_in, C_out, H, W = 2, 8, 16, 16, 16
    K, stride, padding, dilation = 3, 1, 1, 1

    key = jax.random.PRNGKey(0)
    ks = jax.random.split(key, 9)

    # op_a: SepConv(C_in, C_in, stride)
    params_a = (
        jax.random.normal(ks[0], (K, K, C_in), jnp.float32) * 0.2,   # depthwise
        jax.random.normal(ks[1], (C_in, C_in), jnp.float32) * 0.2,   # 1x1 weight
        jnp.zeros((C_in,), jnp.float32),                             # bias off (affine=True)
        1.0 + 0.1 * jax.random.normal(ks[2], (C_in,), jnp.float32),  # BN gamma
        0.1 * jax.random.normal(ks[3], (C_in,), jnp.float32),        # BN beta
    )
    # op_b: SepConv(C_in, C_out, stride=1)
    params_b = (
        jax.random.normal(ks[4], (K, K, C_in), jnp.float32) * 0.2,
        jax.random.normal(ks[5], (C_in, C_out), jnp.float32) * 0.2,
        jnp.zeros((C_out,), jnp.float32),
        1.0 + 0.1 * jax.random.normal(ks[6], (C_out,), jnp.float32),
        0.1 * jax.random.normal(ks[7], (C_out,), jnp.float32),
    )

    x = jax.random.normal(ks[8], (N, C_in, H, W), jnp.float32)

    out = dual_sep_conv(x, params_a, params_b,
                        stride=stride, padding=padding, dilation=dilation)
    out = jax.block_until_ready(out)

    ref = _ref_dual(x, params_a, params_b,
                    stride=stride, padding=padding, dilation=dilation)
    assert out.shape == (N, C_out, H, W), out.shape
    assert jnp.allclose(out, ref, rtol=1e-3, atol=1e-3), float(
        jnp.max(jnp.abs(out - ref)))

    print("KERNEL_OK")
</pallas_src>

<mosaic_0001>
module attributes {stable_mosaic.version = 11 : i64} {
  func.func @kernel(%arg0: i32, %arg1: memref<8x1xf32, #tpu.memory_space<vmem>>, %arg2: memref<8x1xf32, #tpu.memory_space<vmem>>, %arg3: memref<8x9xf32, #tpu.memory_space<vmem>>, %arg4: memref<8x8xf32, #tpu.memory_space<vmem>>, %arg5: memref<1x8x256xf32, #tpu.memory_space<vmem>>, %arg6: memref<1x8x256xf32, #tpu.memory_space<vmem>>, %arg7: memref<1x8x1xf32, #tpu.memory_space<vmem>>, %arg8: memref<1x8x1xf32, #tpu.memory_space<vmem>>) attributes {dimension_semantics = [#tpu.dimension_semantics<parallel>], iteration_bounds = array<i64: 2>, scalar_prefetch = 0 : i64, scratch_operands = 0 : i64, tpu.core_type = #tpu.core_type<tc>, window_params = [{pipeline_mode = #tpu.pipeline_mode<synchronous>, transform_indices = @transform_0, window_bounds = array<i64: 8, 1>}, {pipeline_mode = #tpu.pipeline_mode<synchronous>, transform_indices = @transform_1, window_bounds = array<i64: 8, 1>}, {pipeline_mode = #tpu.pipeline_mode<synchronous>, transform_indices = @transform_2, window_bounds = array<i64: 8, 9>}, {pipeline_mode = #tpu.pipeline_mode<synchronous>, transform_indices = @transform_3, window_bounds = array<i64: 8, 8>}, {transform_indices = @transform_4, window_bounds = array<i64: 1, 8, 256>}, {transform_indices = @transform_5, window_bounds = array<i64: 1, 8, 256>}, {transform_indices = @transform_6, window_bounds = array<i64: 1, 8, 1>}, {transform_indices = @transform_7, window_bounds = array<i64: 1, 8, 1>}]} {
    %c0 = arith.constant 0 : index
    %c0_0 = arith.constant 0 : index
    %c0_1 = arith.constant 0 : index
    %0 = vector.load %arg5[%c0, %c0_0, %c0_1] : memref<1x8x256xf32, #tpu.memory_space<vmem>>, vector<1x8x256xf32>
    %1 = vector.shape_cast %0 : vector<1x8x256xf32> to vector<8x256xf32>
    %c0_2 = arith.constant 0 : index
    %c0_3 = arith.constant 0 : index
    %2 = vector.load %arg1[%c0_2, %c0_3] : memref<8x1xf32, #tpu.memory_space<vmem>>, vector<8x1xf32>
    %3 = vector.broadcast %2 : vector<8x1xf32> to vector<8x256xf32>
    %4 = arith.mulf %1, %3 : vector<8x256xf32>
    %c0_4 = arith.constant 0 : index
    %c0_5 = arith.constant 0 : index
    %5 = vector.load %arg2[%c0_4, %c0_5] : memref<8x1xf32, #tpu.memory_space<vmem>>, vector<8x1xf32>
    %6 = vector.broadcast %5 : vector<8x1xf32> to vector<8x256xf32>
    %7 = arith.addf %4, %6 : vector<8x256xf32>
    %cst = arith.constant 0.000000e+00 : f32
    %8 = vector.broadcast %cst : f32 to vector<8x256xf32>
    %9 = arith.maximumf %7, %8 : vector<8x256xf32>
    %cst_6 = arith.constant 0.000000e+00 : f32
    %10 = vector.broadcast %cst_6 : f32 to vector<8x17xf32>
    %11 = tpu.concatenate %10, %9, %10 in 1 : vector<8x17xf32>, vector<8x256xf32>, vector<8x17xf32> -> vector<8x290xf32>
    %12 = tpu.iota {dimensions = array<i32: 1>} : vector<1x256xi32>
    %c16_i32 = arith.constant 16 : i32
    %c0_i32 = arith.constant 0 : i32
    %13 = arith.cmpi eq, %c16_i32, %c0_i32 : i32
    %c1_i32 = arith.constant 1 : i32
    %14 = arith.select %13, %c1_i32, %c16_i32 : i32
    %15 = vector.broadcast %14 : i32 to vector<1x256xi32>
    %16 = arith.remsi %12, %15 : vector<1x256xi32>
    %c0_i32_7 = arith.constant 0 : i32
    %17 = vector.broadcast %c0_i32_7 : i32 to vector<1x256xi32>
    %18 = arith.cmpi ne, %16, %17 : vector<1x256xi32>
    %c0_i32_8 = arith.constant 0 : i32
    %19 = vector.broadcast %c0_i32_8 : i32 to vector<1x256xi32>
    %20 = arith.cmpi slt, %16, %19 : vector<1x256xi32>
    %c0_i32_9 = arith.constant 0 : i32
    %21 = arith.cmpi slt, %14, %c0_i32_9 : i32
    %22 = vector.broadcast %21 : i1 to vector<1x256xi1>
    %23 = vector.broadcast %22 : vector<1x256xi1> to vector<1x256xi1>
    %24 = arith.xori %20, %23 : vector<1x256xi1>
    %25 = arith.andi %24, %18 : vector<1x256xi1>
    %26 = vector.broadcast %14 : i32 to vector<1x256xi32>
    %27 = arith.addi %16, %26 : vector<1x256xi32>
    %28 = arith.select %25, %27, %16 : vector<1x256xi1>, vector<1x256xi32>
    %c1_i32_10 = arith.constant 1 : i32
    %29 = vector.broadcast %c1_i32_10 : i32 to vector<1x256xi32>
    %30 = arith.cmpi sge, %28, %29 : vector<1x256xi32>
    %c15_i32 = arith.constant 15 : i32
    %31 = vector.broadcast %c15_i32 : i32 to vector<1x256xi32>
    %32 = arith.cmpi slt, %28, %31 : vector<1x256xi32>
    %cst_11 = arith.constant 0.000000e+00 : f32
    %33 = vector.broadcast %cst_11 : f32 to vector<8x256xf32>
    %34 = vector.extract_strided_slice %11 {offsets = [0, 0], sizes = [8, 256], strides = [1, 1]} : vector<8x290xf32> to vector<8x256xf32>
    %cst_12 = arith.constant 0.000000e+00 : f32
    %35 = vector.shape_cast %30 : vector<1x256xi1> to vector<1x256xi1>
    %36 = vector.broadcast %35 : vector<1x256xi1> to vector<8x256xi1>
    %37 = vector.broadcast %cst_12 : f32 to vector<8x256xf32>
    %38 = arith.select %36, %34, %37 : vector<8x256xi1>, vector<8x256xf32>
    %c0_13 = arith.constant 0 : index
    %c0_14 = arith.constant 0 : index
    %39 = vector.load %arg3[%c0_13, %c0_14] : memref<8x9xf32, #tpu.memory_space<vmem>>, vector<8x1xf32>
    %40 = vector.broadcast %39 : vector<8x1xf32> to vector<8x256xf32>
    %41 = arith.mulf %38, %40 : vector<8x256xf32>
    %42 = arith.addf %33, %41 : vector<8x256xf32>
    %43 = vector.extract_strided_slice %11 {offsets = [0, 1], sizes = [8, 256], strides = [1, 1]} : vector<8x290xf32> to vector<8x256xf32>
    %c0_15 = arith.constant 0 : index
    %c1 = arith.constant 1 : index
    %44 = vector.load %arg3[%c0_15, %c1] : memref<8x9xf32, #tpu.memory_space<vmem>>, vector<8x1xf32>
    %45 = vector.broadcast %44 : vector<8x1xf32> to vector<8x256xf32>
    %46 = arith.mulf %43, %45 : vector<8x256xf32>
    %47 = arith.addf %42, %46 : vector<8x256xf32>
    %48 = vector.extract_strided_slice %11 {offsets = [0, 2], sizes = [8, 256], strides = [1, 1]} : vector<8x290xf32> to vector<8x256xf32>
    %cst_16 = arith.constant 0.000000e+00 : f32
    %49 = vector.shape_cast %32 : vector<1x256xi1> to vector<1x256xi1>
    %50 = vector.broadcast %49 : vector<1x256xi1> to vector<8x256xi1>
    %51 = vector.broadcast %cst_16 : f32 to vector<8x256xf32>
    %52 = arith.select %50, %48, %51 : vector<8x256xi1>, vector<8x256xf32>
    %c0_17 = arith.constant 0 : index
    %c2 = arith.constant 2 : index
    %53 = vector.load %arg3[%c0_17, %c2] : memref<8x9xf32, #tpu.memory_space<vmem>>, vector<8x1xf32>
    %54 = vector.broadcast %53 : vector<8x1xf32> to vector<8x256xf32>
    %55 = arith.mulf %52, %54 : vector<8x256xf32>
    %56 = arith.addf %47, %55 : vector<8x256xf32>
    %57 = vector.extract_strided_slice %11 {offsets = [0, 16], sizes = [8, 256], strides = [1, 1]} : vector<8x290xf32> to vector<8x256xf32>
    %cst_18 = arith.constant 0.000000e+00 : f32
    %58 = vector.shape_cast %30 : vector<1x256xi1> to vector<1x256xi1>
    %59 = vector.broadcast %58 : vector<1x256xi1> to vector<8x256xi1>
    %60 = vector.broadcast %cst_18 : f32 to vector<8x256xf32>
    %61 = arith.select %59, %57, %60 : vector<8x256xi1>, vector<8x256xf32>
    %c0_19 = arith.constant 0 : index
    %c3 = arith.constant 3 : index
    %62 = vector.load %arg3[%c0_19, %c3] : memref<8x9xf32, #tpu.memory_space<vmem>>, vector<8x1xf32>
    %63 = vector.broadcast %62 : vector<8x1xf32> to vector<8x256xf32>
    %64 = arith.mulf %61, %63 : vector<8x256xf32>
    %65 = arith.addf %56, %64 : vector<8x256xf32>
    %66 = vector.extract_strided_slice %11 {offsets = [0, 17], sizes = [8, 256], strides = [1, 1]} : vector<8x290xf32> to vector<8x256xf32>
    %c0_20 = arith.constant 0 : index
    %c4 = arith.constant 4 : index
    %67 = vector.load %arg3[%c0_20, %c4] : memref<8x9xf32, #tpu.memory_space<vmem>>, vector<8x1xf32>
    %68 = vector.broadcast %67 : vector<8x1xf32> to vector<8x256xf32>
    %69 = arith.mulf %66, %68 : vector<8x256xf32>
    %70 = arith.addf %65, %69 : vector<8x256xf32>
    %71 = vector.extract_strided_slice %11 {offsets = [0, 18], sizes = [8, 256], strides = [1, 1]} : vector<8x290xf32> to vector<8x256xf32>
    %cst_21 = arith.constant 0.000000e+00 : f32
    %72 = vector.shape_cast %32 : vector<1x256xi1> to vector<1x256xi1>
    %73 = vector.broadcast %72 : vector<1x256xi1> to vector<8x256xi1>
    %74 = vector.broadcast %cst_21 : f32 to vector<8x256xf32>
    %75 = arith.select %73, %71, %74 : vector<8x256xi1>, vector<8x256xf32>
    %c0_22 = arith.constant 0 : index
    %c5 = arith.constant 5 : index
    %76 = vector.load %arg3[%c0_22, %c5] : memref<8x9xf32, #tpu.memory_space<vmem>>, vector<8x1xf32>
    %77 = vector.broadcast %76 : vector<8x1xf32> to vector<8x256xf32>
    %78 = arith.mulf %75, %77 : vector<8x256xf32>
    %79 = arith.addf %70, %78 : vector<8x256xf32>
    %80 = vector.extract_strided_slice %11 {offsets = [0, 32], sizes = [8, 256], strides = [1, 1]} : vector<8x290xf32> to vector<8x256xf32>
    %cst_23 = arith.constant 0.000000e+00 : f32
    %81 = vector.shape_cast %30 : vector<1x256xi1> to vector<1x256xi1>
    %82 = vector.broadcast %81 : vector<1x256xi1> to vector<8x256xi1>
    %83 = vector.broadcast %cst_23 : f32 to vector<8x256xf32>
    %84 = arith.select %82, %80, %83 : vector<8x256xi1>, vector<8x256xf32>
    %c0_24 = arith.constant 0 : index
    %c6 = arith.constant 6 : index
    %85 = vector.load %arg3[%c0_24, %c6] : memref<8x9xf32, #tpu.memory_space<vmem>>, vector<8x1xf32>
    %86 = vector.broadcast %85 : vector<8x1xf32> to vector<8x256xf32>
    %87 = arith.mulf %84, %86 : vector<8x256xf32>
    %88 = arith.addf %79, %87 : vector<8x256xf32>
    %89 = vector.extract_strided_slice %11 {offsets = [0, 33], sizes = [8, 256], strides = [1, 1]} : vector<8x290xf32> to vector<8x256xf32>
    %c0_25 = arith.constant 0 : index
    %c7 = arith.constant 7 : index
    %90 = vector.load %arg3[%c0_25, %c7] : memref<8x9xf32, #tpu.memory_space<vmem>>, vector<8x1xf32>
    %91 = vector.broadcast %90 : vector<8x1xf32> to vector<8x256xf32>
    %92 = arith.mulf %89, %91 : vector<8x256xf32>
    %93 = arith.addf %88, %92 : vector<8x256xf32>
    %94 = vector.extract_strided_slice %11 {offsets = [0, 34], sizes = [8, 256], strides = [1, 1]} : vector<8x290xf32> to vector<8x256xf32>
    %cst_26 = arith.constant 0.000000e+00 : f32
    %95 = vector.shape_cast %32 : vector<1x256xi1> to vector<1x256xi1>
    %96 = vector.broadcast %95 : vector<1x256xi1> to vector<8x256xi1>
    %97 = vector.broadcast %cst_26 : f32 to vector<8x256xf32>
    %98 = arith.select %96, %94, %97 : vector<8x256xi1>, vector<8x256xf32>
    %c0_27 = arith.constant 0 : index
    %c8 = arith.constant 8 : index
    %99 = vector.load %arg3[%c0_27, %c8] : memref<8x9xf32, #tpu.memory_space<vmem>>, vector<8x1xf32>
    %100 = vector.broadcast %99 : vector<8x1xf32> to vector<8x256xf32>
    %101 = arith.mulf %98, %100 : vector<8x256xf32>
    %102 = arith.addf %93, %101 : vector<8x256xf32>
    %c0_28 = arith.constant 0 : index
    %c0_29 = arith.constant 0 : index
    %103 = vector.load %arg4[%c0_28, %c0_29] : memref<8x8xf32, #tpu.memory_space<vmem>>, vector<8x8xf32>
    %cst_30 = arith.constant dense<0.000000e+00> : vector<8x256xf32>
    %104 = tpu.matmul %103, %102, %cst_30 {dimension_numbers = #tpu.dot_dimension_numbers<[1], [0], [0], [1], [0, 0, 1, 1], [], []>} : vector<8x8xf32>, vector<8x256xf32>, vector<8x256xf32> -> vector<8x256xf32>
    %c0_31 = arith.constant 0 : index
    %c0_32 = arith.constant 0 : index
    %c0_33 = arith.constant 0 : index
    %105 = vector.load %arg6[%c0_31, %c0_32, %c0_33] : memref<1x8x256xf32, #tpu.memory_space<vmem>>, vector<1x8x256xf32>
    %106 = vector.shape_cast %105 : vector<1x8x256xf32> to vector<8x256xf32>
    %107 = vector.shape_cast %104 : vector<8x256xf32> to vector<1x8x256xf32>
    tpu.vector_store %arg6[%c0_31, %c0_32, %c0_33], %107 {strides = array<i32>} : memref<1x8x256xf32, #tpu.memory_space<vmem>>, vector<1x8x256xf32>,
    %cst_34 = arith.constant dense<0.000000e+00> : vector<8xf32>
    %108 = vector.multi_reduction <add>, %104, %cst_34 [1] : vector<8x256xf32> to vector<8xf32>
    %109 = vector.shape_cast %108 : vector<8xf32> to vector<8x1xf32>
    %c0_35 = arith.constant 0 : index
    %c0_36 = arith.constant 0 : index
    %c0_37 = arith.constant 0 : index
    %110 = vector.load %arg7[%c0_35, %c0_36, %c0_37] : memref<1x8x1xf32, #tpu.memory_space<vmem>>, vector<1x8x1xf32>
    %111 = vector.shape_cast %110 : vector<1x8x1xf32> to vector<8x1xf32>
    %112 = vector.shape_cast %109 : vector<8x1xf32> to vector<1x8x1xf32>
    tpu.vector_store %arg7[%c0_35, %c0_36, %c0_37], %112 {strides = array<i32>} : memref<1x8x1xf32, #tpu.memory_space<vmem>>, vector<1x8x1xf32>,
    %113 = arith.mulf %104, %104 : vector<8x256xf32>
    %cst_38 = arith.constant dense<0.000000e+00> : vector<8xf32>
    %114 = vector.multi_reduction <add>, %113, %cst_38 [1] : vector<8x256xf32> to vector<8xf32>
    %115 = vector.shape_cast %114 : vector<8xf32> to vector<8x1xf32>
    %c0_39 = arith.constant 0 : index
    %c0_40 = arith.constant 0 : index
    %c0_41 = arith.constant 0 : index
    %116 = vector.load %arg8[%c0_39, %c0_40, %c0_41] : memref<1x8x1xf32, #tpu.memory_space<vmem>>, vector<1x8x1xf32>
    %117 = vector.shape_cast %116 : vector<1x8x1xf32> to vector<8x1xf32>
    %118 = vector.shape_cast %115 : vector<8x1xf32> to vector<1x8x1xf32>
    tpu.vector_store %arg8[%c0_39, %c0_40, %c0_41], %118 {strides = array<i32>} : memref<1x8x1xf32, #tpu.memory_space<vmem>>, vector<1x8x1xf32>,
    return
  }
  func.func @transform_0(%arg0: i32) -> (i32, i32) {
    %c0_i32 = arith.constant 0 : i32
    %c0_i32_0 = arith.constant 0 : i32
    %c0_i32_1 = arith.constant 0 : i32
    return %c0_i32, %c0_i32_0 : i32, i32
  }
  func.func @transform_1(%arg0: i32) -> (i32, i32) {
    %c0_i32 = arith.constant 0 : i32
    %c0_i32_0 = arith.constant 0 : i32
    %c0_i32_1 = arith.constant 0 : i32
    return %c0_i32, %c0_i32_0 : i32, i32
  }
  func.func @transform_2(%arg0: i32) -> (i32, i32) {
    %c0_i32 = arith.constant 0 : i32
    %c0_i32_0 = arith.constant 0 : i32
    %c0_i32_1 = arith.constant 0 : i32
    return %c0_i32, %c0_i32_0 : i32, i32
  }
  func.func @transform_3(%arg0: i32) -> (i32, i32) {
    %c0_i32 = arith.constant 0 : i32
    %c0_i32_0 = arith.constant 0 : i32
    %c0_i32_1 = arith.constant 0 : i32
    return %c0_i32, %c0_i32_0 : i32, i32
  }
  func.func @transform_4(%arg0: i32) -> (i32, i32, i32) {
    %c0_i32 = arith.constant 0 : i32
    %c0_i32_0 = arith.constant 0 : i32
    %c0_i32_1 = arith.constant 0 : i32
    return %arg0, %c0_i32, %c0_i32_0 : i32, i32, i32
  }
  func.func @transform_5(%arg0: i32) -> (i32, i32, i32) {
    %c0_i32 = arith.constant 0 : i32
    %c0_i32_0 = arith.constant 0 : i32
    %c0_i32_1 = arith.constant 0 : i32
    return %arg0, %c0_i32, %c0_i32_0 : i32, i32, i32
  }
  func.func @transform_6(%arg0: i32) -> (i32, i32, i32) {
    %c0_i32 = arith.constant 0 : i32
    %c0_i32_0 = arith.constant 0 : i32
    %c0_i32_1 = arith.constant 0 : i32
    return %arg0, %c0_i32, %c0_i32_0 : i32, i32, i32
  }
  func.func @transform_7(%arg0: i32) -> (i32, i32, i32) {
    %c0_i32 = arith.constant 0 : i32
    %c0_i32_0 = arith.constant 0 : i32
    %c0_i32_1 = arith.constant 0 : i32
    return %arg0, %c0_i32, %c0_i32_0 : i32, i32, i32
  }
}

module attributes {stable_mosaic.version = 11 : i64} {
  func.func @kernel(%arg0: i32, %arg1: memref<8x1xf32, #tpu.memory_space<vmem>>, %arg2: memref<8x1xf32, #tpu.memory_space<vmem>>, %arg3: memref<8x9xf32, #tpu.memory_space<vmem>>, %arg4: memref<16x8xf32, #tpu.memory_space<vmem>>, %arg5: memref<1x8x256xf32, #tpu.memory_space<vmem>>, %arg6: memref<1x16x256xf32, #tpu.memory_space<vmem>>, %arg7: memref<1x16x1xf32, #tpu.memory_space<vmem>>, %arg8: memref<1x16x1xf32, #tpu.memory_space<vmem>>) attributes {dimension_semantics = [#tpu.dimension_semantics<parallel>], iteration_bounds = array<i64: 2>, scalar_prefetch = 0 : i64, scratch_operands = 0 : i64, tpu.core_type = #tpu.core_type<tc>, window_params = [{pipeline_mode = #tpu.pipeline_mode<synchronous>, transform_indices = @transform_0, window_bounds = array<i64: 8, 1>}, {pipeline_mode = #tpu.pipeline_mode<synchronous>, transform_indices = @transform_1, window_bounds = array<i64: 8, 1>}, {pipeline_mode = #tpu.pipeline_mode<synchronous>, transform_indices = @transform_2, window_bounds = array<i64: 8, 9>}, {pipeline_mode = #tpu.pipeline_mode<synchronous>, transform_indices = @transform_3, window_bounds = array<i64: 16, 8>}, {transform_indices = @transform_4, window_bounds = array<i64: 1, 8, 256>}, {transform_indices = @transform_5, window_bounds = array<i64: 1, 16, 256>}, {transform_indices = @transform_6, window_bounds = array<i64: 1, 16, 1>}, {transform_indices = @transform_7, window_bounds = array<i64: 1, 16, 1>}]} {
    %c0 = arith.constant 0 : index
    %c0_0 = arith.constant 0 : index
    %c0_1 = arith.constant 0 : index
    %0 = vector.load %arg5[%c0, %c0_0, %c0_1] : memref<1x8x256xf32, #tpu.memory_space<vmem>>, vector<1x8x256xf32>
    %1 = vector.shape_cast %0 : vector<1x8x256xf32> to vector<8x256xf32>
    %c0_2 = arith.constant 0 : index
    %c0_3 = arith.constant 0 : index
    %2 = vector.load %arg1[%c0_2, %c0_3] : memref<8x1xf32, #tpu.memory_space<vmem>>, vector<8x1xf32>
    %3 = vector.broadcast %2 : vector<8x1xf32> to vector<8x256xf32>
    %4 = arith.mulf %1, %3 : vector<8x256xf32>
    %c0_4 = arith.constant 0 : index
    %c0_5 = arith.constant 0 : index
    %5 = vector.load %arg2[%c0_4, %c0_5] : memref<8x1xf32, #tpu.memory_space<vmem>>, vector<8x1xf32>
    %6 = vector.broadcast %5 : vector<8x1xf32> to vector<8x256xf32>
    %7 = arith.addf %4, %6 : vector<8x256xf32>
    %cst = arith.constant 0.000000e+00 : f32
    %8 = vector.broadcast %cst : f32 to vector<8x256xf32>
    %9 = arith.maximumf %7, %8 : vector<8x256xf32>
    %cst_6 = arith.constant 0.000000e+00 : f32
    %10 = vector.broadcast %cst_6 : f32 to vector<8x17xf32>
    %11 = tpu.concatenate %10, %9, %10 in 1 : vector<8x17xf32>, vector<8x256xf32>, vector<8x17xf32> -> vector<8x290xf32>
    %12 = tpu.iota {dimensions = array<i32: 1>} : vector<1x256xi32>
    %c16_i32 = arith.constant 16 : i32
    %c0_i32 = arith.constant 0 : i32
    %13 = arith.cmpi eq, %c16_i32, %c0_i32 : i32
    %c1_i32 = arith.constant 1 : i32
    %14 = arith.select %13, %c1_i32, %c16_i32 : i32
    %15 = vector.broadcast %14 : i32 to vector<1x256xi32>
    %16 = arith.remsi %12, %15 : vector<1x256xi32>
    %c0_i32_7 = arith.constant 0 : i32
    %17 = vector.broadcast %c0_i32_7 : i32 to vector<1x256xi32>
    %18 = arith.cmpi ne, %16, %17 : vector<1x256xi32>
    %c0_i32_8 = arith.constant 0 : i32
    %19 = vector.broadcast %c0_i32_8 : i32 to vector<1x256xi32>
    %20 = arith.cmpi slt, %16, %19 : vector<1x256xi32>
    %c0_i32_9 = arith.constant 0 : i32
    %21 = arith.cmpi slt, %14, %c0_i32_9 : i32
    %22 = vector.broadcast %21 : i1 to vector<1x256xi1>
    %23 = vector.broadcast %22 : vector<1x256xi1> to vector<1x256xi1>
    %24 = arith.xori %20, %23 : vector<1x256xi1>
    %25 = arith.andi %24, %18 : vector<1x256xi1>
    %26 = vector.broadcast %14 : i32 to vector<1x256xi32>
    %27 = arith.addi %16, %26 : vector<1x256xi32>
    %28 = arith.select %25, %27, %16 : vector<1x256xi1>, vector<1x256xi32>
    %c1_i32_10 = arith.constant 1 : i32
    %29 = vector.broadcast %c1_i32_10 : i32 to vector<1x256xi32>
    %30 = arith.cmpi sge, %28, %29 : vector<1x256xi32>
    %c15_i32 = arith.constant 15 : i32
    %31 = vector.broadcast %c15_i32 : i32 to vector<1x256xi32>
    %32 = arith.cmpi slt, %28, %31 : vector<1x256xi32>
    %cst_11 = arith.constant 0.000000e+00 : f32
    %33 = vector.broadcast %cst_11 : f32 to vector<8x256xf32>
    %34 = vector.extract_strided_slice %11 {offsets = [0, 0], sizes = [8, 256], strides = [1, 1]} : vector<8x290xf32> to vector<8x256xf32>
    %cst_12 = arith.constant 0.000000e+00 : f32
    %35 = vector.shape_cast %30 : vector<1x256xi1> to vector<1x256xi1>
    %36 = vector.broadcast %35 : vector<1x256xi1> to vector<8x256xi1>
    %37 = vector.broadcast %cst_12 : f32 to vector<8x256xf32>
    %38 = arith.select %36, %34, %37 : vector<8x256xi1>, vector<8x256xf32>
    %c0_13 = arith.constant 0 : index
    %c0_14 = arith.constant 0 : index
    %39 = vector.load %arg3[%c0_13, %c0_14] : memref<8x9xf32, #tpu.memory_space<vmem>>, vector<8x1xf32>
    %40 = vector.broadcast %39 : vector<8x1xf32> to vector<8x256xf32>
    %41 = arith.mulf %38, %40 : vector<8x256xf32>
    %42 = arith.addf %33, %41 : vector<8x256xf32>
    %43 = vector.extract_strided_slice %11 {offsets = [0, 1], sizes = [8, 256], strides = [1, 1]} : vector<8x290xf32> to vector<8x256xf32>
    %c0_15 = arith.constant 0 : index
    %c1 = arith.constant 1 : index
    %44 = vector.load %arg3[%c0_15, %c1] : memref<8x9xf32, #tpu.memory_space<vmem>>, vector<8x1xf32>
    %45 = vector.broadcast %44 : vector<8x1xf32> to vector<8x256xf32>
    %46 = arith.mulf %43, %45 : vector<8x256xf32>
    %47 = arith.addf %42, %46 : vector<8x256xf32>
    %48 = vector.extract_strided_slice %11 {offsets = [0, 2], sizes = [8, 256], strides = [1, 1]} : vector<8x290xf32> to vector<8x256xf32>
    %cst_16 = arith.constant 0.000000e+00 : f32
    %49 = vector.shape_cast %32 : vector<1x256xi1> to vector<1x256xi1>
    %50 = vector.broadcast %49 : vector<1x256xi1> to vector<8x256xi1>
    %51 = vector.broadcast %cst_16 : f32 to vector<8x256xf32>
    %52 = arith.select %50, %48, %51 : vector<8x256xi1>, vector<8x256xf32>
    %c0_17 = arith.constant 0 : index
    %c2 = arith.constant 2 : index
    %53 = vector.load %arg3[%c0_17, %c2] : memref<8x9xf32, #tpu.memory_space<vmem>>, vector<8x1xf32>
    %54 = vector.broadcast %53 : vector<8x1xf32> to vector<8x256xf32>
    %55 = arith.mulf %52, %54 : vector<8x256xf32>
    %56 = arith.addf %47, %55 : vector<8x256xf32>
    %57 = vector.extract_strided_slice %11 {offsets = [0, 16], sizes = [8, 256], strides = [1, 1]} : vector<8x290xf32> to vector<8x256xf32>
    %cst_18 = arith.constant 0.000000e+00 : f32
    %58 = vector.shape_cast %30 : vector<1x256xi1> to vector<1x256xi1>
    %59 = vector.broadcast %58 : vector<1x256xi1> to vector<8x256xi1>
    %60 = vector.broadcast %cst_18 : f32 to vector<8x256xf32>
    %61 = arith.select %59, %57, %60 : vector<8x256xi1>, vector<8x256xf32>
    %c0_19 = arith.constant 0 : index
    %c3 = arith.constant 3 : index
    %62 = vector.load %arg3[%c0_19, %c3] : memref<8x9xf32, #tpu.memory_space<vmem>>, vector<8x1xf32>
    %63 = vector.broadcast %62 : vector<8x1xf32> to vector<8x256xf32>
    %64 = arith.mulf %61, %63 : vector<8x256xf32>
    %65 = arith.addf %56, %64 : vector<8x256xf32>
    %66 = vector.extract_strided_slice %11 {offsets = [0, 17], sizes = [8, 256], strides = [1, 1]} : vector<8x290xf32> to vector<8x256xf32>
    %c0_20 = arith.constant 0 : index
    %c4 = arith.constant 4 : index
    %67 = vector.load %arg3[%c0_20, %c4] : memref<8x9xf32, #tpu.memory_space<vmem>>, vector<8x1xf32>
    %68 = vector.broadcast %67 : vector<8x1xf32> to vector<8x256xf32>
    %69 = arith.mulf %66, %68 : vector<8x256xf32>
    %70 = arith.addf %65, %69 : vector<8x256xf32>
    %71 = vector.extract_strided_slice %11 {offsets = [0, 18], sizes = [8, 256], strides = [1, 1]} : vector<8x290xf32> to vector<8x256xf32>
    %cst_21 = arith.constant 0.000000e+00 : f32
    %72 = vector.shape_cast %32 : vector<1x256xi1> to vector<1x256xi1>
    %73 = vector.broadcast %72 : vector<1x256xi1> to vector<8x256xi1>
    %74 = vector.broadcast %cst_21 : f32 to vector<8x256xf32>
    %75 = arith.select %73, %71, %74 : vector<8x256xi1>, vector<8x256xf32>
    %c0_22 = arith.constant 0 : index
    %c5 = arith.constant 5 : index
    %76 = vector.load %arg3[%c0_22, %c5] : memref<8x9xf32, #tpu.memory_space<vmem>>, vector<8x1xf32>
    %77 = vector.broadcast %76 : vector<8x1xf32> to vector<8x256xf32>
    %78 = arith.mulf %75, %77 : vector<8x256xf32>
    %79 = arith.addf %70, %78 : vector<8x256xf32>
    %80 = vector.extract_strided_slice %11 {offsets = [0, 32], sizes = [8, 256], strides = [1, 1]} : vector<8x290xf32> to vector<8x256xf32>
    %cst_23 = arith.constant 0.000000e+00 : f32
    %81 = vector.shape_cast %30 : vector<1x256xi1> to vector<1x256xi1>
    %82 = vector.broadcast %81 : vector<1x256xi1> to vector<8x256xi1>
    %83 = vector.broadcast %cst_23 : f32 to vector<8x256xf32>
    %84 = arith.select %82, %80, %83 : vector<8x256xi1>, vector<8x256xf32>
    %c0_24 = arith.constant 0 : index
    %c6 = arith.constant 6 : index
    %85 = vector.load %arg3[%c0_24, %c6] : memref<8x9xf32, #tpu.memory_space<vmem>>, vector<8x1xf32>
    %86 = vector.broadcast %85 : vector<8x1xf32> to vector<8x256xf32>
    %87 = arith.mulf %84, %86 : vector<8x256xf32>
    %88 = arith.addf %79, %87 : vector<8x256xf32>
    %89 = vector.extract_strided_slice %11 {offsets = [0, 33], sizes = [8, 256], strides = [1, 1]} : vector<8x290xf32> to vector<8x256xf32>
    %c0_25 = arith.constant 0 : index
    %c7 = arith.constant 7 : index
    %90 = vector.load %arg3[%c0_25, %c7] : memref<8x9xf32, #tpu.memory_space<vmem>>, vector<8x1xf32>
    %91 = vector.broadcast %90 : vector<8x1xf32> to vector<8x256xf32>
    %92 = arith.mulf %89, %91 : vector<8x256xf32>
    %93 = arith.addf %88, %92 : vector<8x256xf32>
    %94 = vector.extract_strided_slice %11 {offsets = [0, 34], sizes = [8, 256], strides = [1, 1]} : vector<8x290xf32> to vector<8x256xf32>
    %cst_26 = arith.constant 0.000000e+00 : f32
    %95 = vector.shape_cast %32 : vector<1x256xi1> to vector<1x256xi1>
    %96 = vector.broadcast %95 : vector<1x256xi1> to vector<8x256xi1>
    %97 = vector.broadcast %cst_26 : f32 to vector<8x256xf32>
    %98 = arith.select %96, %94, %97 : vector<8x256xi1>, vector<8x256xf32>
    %c0_27 = arith.constant 0 : index
    %c8 = arith.constant 8 : index
    %99 = vector.load %arg3[%c0_27, %c8] : memref<8x9xf32, #tpu.memory_space<vmem>>, vector<8x1xf32>
    %100 = vector.broadcast %99 : vector<8x1xf32> to vector<8x256xf32>
    %101 = arith.mulf %98, %100 : vector<8x256xf32>
    %102 = arith.addf %93, %101 : vector<8x256xf32>
    %c0_28 = arith.constant 0 : index
    %c0_29 = arith.constant 0 : index
    %103 = vector.load %arg4[%c0_28, %c0_29] : memref<16x8xf32, #tpu.memory_space<vmem>>, vector<16x8xf32>
    %cst_30 = arith.constant dense<0.000000e+00> : vector<16x256xf32>
    %104 = tpu.matmul %103, %102, %cst_30 {dimension_numbers = #tpu.dot_dimension_numbers<[1], [0], [0], [1], [0, 0, 1, 1], [], []>} : vector<16x8xf32>, vector<8x256xf32>, vector<16x256xf32> -> vector<16x256xf32>
    %c0_31 = arith.constant 0 : index
    %c0_32 = arith.constant 0 : index
    %c0_33 = arith.constant 0 : index
    %105 = vector.load %arg6[%c0_31, %c0_32, %c0_33] : memref<1x16x256xf32, #tpu.memory_space<vmem>>, vector<1x16x256xf32>
    %106 = vector.shape_cast %105 : vector<1x16x256xf32> to vector<16x256xf32>
    %107 = vector.shape_cast %104 : vector<16x256xf32> to vector<1x16x256xf32>
    tpu.vector_store %arg6[%c0_31, %c0_32, %c0_33], %107 {strides = array<i32>} : memref<1x16x256xf32, #tpu.memory_space<vmem>>, vector<1x16x256xf32>,
    %cst_34 = arith.constant dense<0.000000e+00> : vector<16xf32>
    %108 = vector.multi_reduction <add>, %104, %cst_34 [1] : vector<16x256xf32> to vector<16xf32>
    %109 = vector.shape_cast %108 : vector<16xf32> to vector<16x1xf32>
    %c0_35 = arith.constant 0 : index
    %c0_36 = arith.constant 0 : index
    %c0_37 = arith.constant 0 : index
    %110 = vector.load %arg7[%c0_35, %c0_36, %c0_37] : memref<1x16x1xf32, #tpu.memory_space<vmem>>, vector<1x16x1xf32>
    %111 = vector.shape_cast %110 : vector<1x16x1xf32> to vector<16x1xf32>
    %112 = vector.shape_cast %109 : vector<16x1xf32> to vector<1x16x1xf32>
    tpu.vector_store %arg7[%c0_35, %c0_36, %c0_37], %112 {strides = array<i32>} : memref<1x16x1xf32, #tpu.memory_space<vmem>>, vector<1x16x1xf32>,
    %113 = arith.mulf %104, %104 : vector<16x256xf32>
    %cst_38 = arith.constant dense<0.000000e+00> : vector<16xf32>
    %114 = vector.multi_reduction <add>, %113, %cst_38 [1] : vector<16x256xf32> to vector<16xf32>
    %115 = vector.shape_cast %114 : vector<16xf32> to vector<16x1xf32>
    %c0_39 = arith.constant 0 : index
    %c0_40 = arith.constant 0 : index
    %c0_41 = arith.constant 0 : index
    %116 = vector.load %arg8[%c0_39, %c0_40, %c0_41] : memref<1x16x1xf32, #tpu.memory_space<vmem>>, vector<1x16x1xf32>
    %117 = vector.shape_cast %116 : vector<1x16x1xf32> to vector<16x1xf32>
    %118 = vector.shape_cast %115 : vector<16x1xf32> to vector<1x16x1xf32>
    tpu.vector_store %arg8[%c0_39, %c0_40, %c0_41], %118 {strides = array<i32>} : memref<1x16x1xf32, #tpu.memory_space<vmem>>, vector<1x16x1xf32>,
    return
  }
  func.func @transform_0(%arg0: i32) -> (i32, i32) {
    %c0_i32 = arith.constant 0 : i32
    %c0_i32_0 = arith.constant 0 : i32
    %c0_i32_1 = arith.constant 0 : i32
    return %c0_i32, %c0_i32_0 : i32, i32
  }
  func.func @transform_1(%arg0: i32) -> (i32, i32) {
    %c0_i32 = arith.constant 0 : i32
    %c0_i32_0 = arith.constant 0 : i32
    %c0_i32_1 = arith.constant 0 : i32
    return %c0_i32, %c0_i32_0 : i32, i32
  }
  func.func @transform_2(%arg0: i32) -> (i32, i32) {
    %c0_i32 = arith.constant 0 : i32
    %c0_i32_0 = arith.constant 0 : i32
    %c0_i32_1 = arith.constant 0 : i32
    return %c0_i32, %c0_i32_0 : i32, i32
  }
  func.func @transform_3(%arg0: i32) -> (i32, i32) {
    %c0_i32 = arith.constant 0 : i32
    %c0_i32_0 = arith.constant 0 : i32
    %c0_i32_1 = arith.constant 0 : i32
    return %c0_i32, %c0_i32_0 : i32, i32
  }
  func.func @transform_4(%arg0: i32) -> (i32, i32, i32) {
    %c0_i32 = arith.constant 0 : i32
    %c0_i32_0 = arith.constant 0 : i32
    %c0_i32_1 = arith.constant 0 : i32
    return %arg0, %c0_i32, %c0_i32_0 : i32, i32, i32
  }
  func.func @transform_5(%arg0: i32) -> (i32, i32, i32) {
    %c0_i32 = arith.constant 0 : i32
    %c0_i32_0 = arith.constant 0 : i32
    %c0_i32_1 = arith.constant 0 : i32
    return %arg0, %c0_i32, %c0_i32_0 : i32, i32, i32
  }
  func.func @transform_6(%arg0: i32) -> (i32, i32, i32) {
    %c0_i32 = arith.constant 0 : i32
    %c0_i32_0 = arith.constant 0 : i32
    %c0_i32_1 = arith.constant 0 : i32
    return %arg0, %c0_i32, %c0_i32_0 : i32, i32, i32
  }
  func.func @transform_7(%arg0: i32) -> (i32, i32, i32) {
    %c0_i32 = arith.constant 0 : i32
    %c0_i32_0 = arith.constant 0 : i32
    %c0_i32_1 = arith.constant 0 : i32
    return %arg0, %c0_i32, %c0_i32_0 : i32, i32, i32
  }
}

module attributes {stable_mosaic.version = 11 : i64} {
  func.func @kernel(%arg0: i32, %arg1: memref<1x16x256xf32, #tpu.memory_space<vmem>>, %arg2: memref<16x1xf32, #tpu.memory_space<vmem>>, %arg3: memref<16x1xf32, #tpu.memory_space<vmem>>, %arg4: memref<1x16x256xf32, #tpu.memory_space<vmem>>) attributes {dimension_semantics = [#tpu.dimension_semantics<parallel>], iteration_bounds = array<i64: 2>, scalar_prefetch = 0 : i64, scratch_operands = 0 : i64, tpu.core_type = #tpu.core_type<tc>, window_params = [{transform_indices = @transform_0, window_bounds = array<i64: 1, 16, 256>}, {pipeline_mode = #tpu.pipeline_mode<synchronous>, transform_indices = @transform_1, window_bounds = array<i64: 16, 1>}, {pipeline_mode = #tpu.pipeline_mode<synchronous>, transform_indices = @transform_2, window_bounds = array<i64: 16, 1>}, {transform_indices = @transform_3, window_bounds = array<i64: 1, 16, 256>}]} {
    %c0 = arith.constant 0 : index
    %c0_0 = arith.constant 0 : index
    %c0_1 = arith.constant 0 : index
    %0 = vector.load %arg1[%c0, %c0_0, %c0_1] : memref<1x16x256xf32, #tpu.memory_space<vmem>>, vector<1x16x256xf32>
    %1 = vector.shape_cast %0 : vector<1x16x256xf32> to vector<16x256xf32>
    %c0_2 = arith.constant 0 : index
    %c0_3 = arith.constant 0 : index
    %2 = vector.load %arg2[%c0_2, %c0_3] : memref<16x1xf32, #tpu.memory_space<vmem>>, vector<16x1xf32>
    %3 = vector.broadcast %2 : vector<16x1xf32> to vector<16x256xf32>
    %4 = arith.mulf %1, %3 : vector<16x256xf32>
    %c0_4 = arith.constant 0 : index
    %c0_5 = arith.constant 0 : index
    %5 = vector.load %arg3[%c0_4, %c0_5] : memref<16x1xf32, #tpu.memory_space<vmem>>, vector<16x1xf32>
    %6 = vector.broadcast %5 : vector<16x1xf32> to vector<16x256xf32>
    %7 = arith.addf %4, %6 : vector<16x256xf32>
    %c0_6 = arith.constant 0 : index
    %c0_7 = arith.constant 0 : index
    %c0_8 = arith.constant 0 : index
    %8 = vector.load %arg4[%c0_6, %c0_7, %c0_8] : memref<1x16x256xf32, #tpu.memory_space<vmem>>, vector<1x16x256xf32>
    %9 = vector.shape_cast %8 : vector<1x16x256xf32> to vector<16x256xf32>
    %10 = vector.shape_cast %7 : vector<16x256xf32> to vector<1x16x256xf32>
    tpu.vector_store %arg4[%c0_6, %c0_7, %c0_8], %10 {strides = array<i32>} : memref<1x16x256xf32, #tpu.memory_space<vmem>>, vector<1x16x256xf32>,
    return
  }
  func.func @transform_0(%arg0: i32) -> (i32, i32, i32) {
    %c0_i32 = arith.constant 0 : i32
    %c0_i32_0 = arith.constant 0 : i32
    %c0_i32_1 = arith.constant 0 : i32
    return %arg0, %c0_i32, %c0_i32_0 : i32, i32, i32
  }
  func.func @transform_1(%arg0: i32) -> (i32, i32) {
    %c0_i32 = arith.constant 0 : i32
    %c0_i32_0 = arith.constant 0 : i32
    %c0_i32_1 = arith.constant 0 : i32
    return %c0_i32, %c0_i32_0 : i32, i32
  }
  func.func @transform_2(%arg0: i32) -> (i32, i32) {
    %c0_i32 = arith.constant 0 : i32
    %c0_i32_0 = arith.constant 0 : i32
    %c0_i32_1 = arith.constant 0 : i32
    return %c0_i32, %c0_i32_0 : i32, i32
  }
  func.func @transform_3(%arg0: i32) -> (i32, i32, i32) {
    %c0_i32 = arith.constant 0 : i32
    %c0_i32_0 = arith.constant 0 : i32
    %c0_i32_1 = arith.constant 0 : i32
    return %arg0, %c0_i32, %c0_i32_0 : i32, i32, i32
  }
}

</mosaic_0001>

<llo_original>
// kernel: dual_sep_conv.5
$region0: #{dual_sep_conv.5}
  #allocation0 [shape = 'u32[]', space=smem, size = 0x4, offset = 0x4, fixed_abs, tag = 'smem constant byte address 0x4 - core index']
  #allocation1 [shape = 'u32[144,128]{1,0:T(1,128)}', space=vmem, size = 0x12000, scoped, tag = 'internal scratch']
  %s0 = inlined_call_operand.vmem [shape: f32[2,16,256], index: 0, kind: input, shape index: {}, may-alias: {0,3}]
  %s1 = inlined_call_operand.vmem [shape: f32[16,1], index: 1, kind: input, shape index: {}]
  %s2 = inlined_call_operand.vmem [shape: f32[16,1], index: 2, kind: input, shape index: {}]
  %s3 = inlined_call_operand.vmem [shape: f32[2,16,256], index: 3, kind: output, shape index: {}, may-alias: {0,3}]
  %s4 = sld [smem:[#allocation0]]
  $region45: #{dual_sep_conv.5} parent=0
    _
  %s6 = ssub.s32 1, %s4
  %s7 = scalar_select 0, %s6, %s4
  loop: start=0, step=1, limit=4
  $region2: #{dual_sep_conv.5} parent=0 // loop_pre_header
    _
  $region3: #{dual_sep_conv.5} parent=0 // loop_header
    %s9 = sphi 0, %s13
    %p10 = scmp.ge.s32.totalorder %s9, 4
    %s19 = sphi 0, %s21
    %s22 = sphi 0, %s19
    %s23 = sphi 0, %s22
    %s39 = sphi 0, %s23
    %s43 = sphi 0, %s43
    %s45 = sphi 0, %s43
    %s46 = sphi 0, %s45
    %s60 = sphi 0, %s46
    %s64 = sphi 0, %s64
    %s66 = sphi 0, %s64
    %s67 = sphi 0, %s66
    %s81 = sphi 0, %s67
    %s87 = sphi 0, %s89
    %s90 = sphi 0, %s87
    %s91 = sphi 0, %s90
    %s107 = sphi 0, %s91
  $region4: #{dual_sep_conv.5} parent=0 // loop_header_branch
    %12 = sbr.rel (%p10) target = $region8
  $region5: #{dual_sep_conv.5} parent=0 // loop_body
    %s14 = ssub.s32 %s9, 1
    %s15 = ssub.s32 %s9, 2
    %s16 = sadd.s32 %s9, 1
    %s17 = ssub.s32 %s9, %s16
    %p18 = scmp.eq.s32.totalorder %s17, 0
    %s20 = sadd.s32 %s19, 1
    %s21 = scalar_select %p18, %s19, %s20
    %p24 = pneg %p18
    %p25 = scmp.eq.s32.totalorder %s9, 1
    %p26 = por %p24, %p25
    %p27 = scmp.ne.s32.totalorder %s19, %s22
    %p28 = scmp.eq.s32.totalorder %s9, 0
    %p29 = por %p27, %p28
    %p30 = scmp.ne.s32.totalorder %s19, %s22
    %p31 = scmp.eq.s32.totalorder %s14, 1
    %p32 = por %p30, %p31
    %p33 = scmp.ne.s32.totalorder %s22, %s23
    %p34 = scmp.eq.s32.totalorder %s14, 0
    %p35 = por %p33, %p34
    %p36 = scmp.ne.s32.totalorder %s22, %s23
    %p37 = scmp.eq.s32.totalorder %s15, 1
    %p38 = por %p36, %p37
    %p40 = scmp.ne.s32.totalorder %s23, %s39
    %p41 = scmp.eq.s32.totalorder %s15, 0
    %p42 = por %p40, %p41
    %s44 = sadd.s32 %s43, 1
    %p47 = scmp.eq.s32.totalorder %s9, 1
    %p48 = scmp.ne.s32.totalorder %s43, %s45
    %p49 = scmp.eq.s32.totalorder %s9, 0
    %p50 = por %p48, %p49
    %p51 = scmp.ne.s32.totalorder %s43, %s45
    %p52 = scmp.eq.s32.totalorder %s14, 1
    %p53 = por %p51, %p52
    %p54 = scmp.ne.s32.totalorder %s45, %s46
    %p55 = scmp.eq.s32.totalorder %s14, 0
    %p56 = por %p54, %p55
    %p57 = scmp.ne.s32.totalorder %s45, %s46
    %p58 = scmp.eq.s32.totalorder %s15, 1
    %p59 = por %p57, %p58
    %p61 = scmp.ne.s32.totalorder %s46, %s60
    %p62 = scmp.eq.s32.totalorder %s15, 0
    %p63 = por %p61, %p62
    %s65 = sadd.s32 %s64, 1
    %p68 = scmp.eq.s32.totalorder %s9, 1
    %p69 = scmp.ne.s32.totalorder %s64, %s66
    %p70 = scmp.eq.s32.totalorder %s9, 0
    %p71 = por %p69, %p70
    %p72 = scmp.ne.s32.totalorder %s64, %s66
    %p73 = scmp.eq.s32.totalorder %s14, 1
    %p74 = por %p72, %p73
    %p75 = scmp.ne.s32.totalorder %s66, %s67
    %p76 = scmp.eq.s32.totalorder %s14, 0
    %p77 = por %p75, %p76
    %p78 = scmp.ne.s32.totalorder %s66, %s67
    %p79 = scmp.eq.s32.totalorder %s15, 1
    %p80 = por %p78, %p79
    %p82 = scmp.ne.s32.totalorder %s67, %s81
    %p83 = scmp.eq.s32.totalorder %s15, 0
    %p84 = por %p82, %p83
    %s85 = ssub.s32 %s9, %s16
    %p86 = scmp.eq.s32.totalorder %s85, 0
    %s88 = sadd.s32 %s87, 1
    %s89 = scalar_select %p86, %s87, %s88
    %p92 = pneg %p86
    %p93 = scmp.eq.s32.totalorder %s9, 1
    %p94 = por %p92, %p93
    %p95 = scmp.ne.s32.totalorder %s87, %s90
    %p96 = scmp.eq.s32.totalorder %s9, 0
    %p97 = por %p95, %p96
    %p98 = scmp.ne.s32.totalorder %s87, %s90
    %p99 = scmp.eq.s32.totalorder %s14, 1
    %p100 = por %p98, %p99
    %p101 = scmp.ne.s32.totalorder %s90, %s91
    %p102 = scmp.eq.s32.totalorder %s14, 0
    %p103 = por %p101, %p102
    %p104 = scmp.ne.s32.totalorder %s90, %s91
    %p105 = scmp.eq.s32.totalorder %s15, 1
    %p106 = por %p104, %p105
    %p108 = scmp.ne.s32.totalorder %s91, %s107
    %p109 = scmp.eq.s32.totalorder %s15, 0
    %p110 = por %p108, %p109
    %p111 = scmp.le.s32.totalorder 1, %s9
    %p112 = scmp.lt.s32.totalorder %s9, 3
    %p113 = pnand %p111, %p112
    %p114 = pneg %p113
    // Predicated region
    $region9: #{dual_sep_conv.5} parent=5 // pred_check
      _
    $region10: #{dual_sep_conv.5} parent=5 // pred_check_branch
      %116 = sbr.rel (%p113) target = $region12
    $region11: #{dual_sep_conv.5} parent=5 // pred_region
      %s117 = ssub.s32 %s9, 1
      // Predicated region
      $region13: #{dual_sep_conv.5} parent=11 // pred_check
        %p118 = pneg %p56
      $region14: #{dual_sep_conv.5} parent=11 // pred_check_branch
        %120 = sbr.rel (%p118) target = $region16
      $region15: #{dual_sep_conv.5} parent=11 // pred_region
        _
      $region16: #{dual_sep_conv.5} parent=11 // pred_fallthru
        _
      // Predicated region
      $region17: #{dual_sep_conv.5} parent=11 // pred_check
        %p121 = pneg %p77
      $region18: #{dual_sep_conv.5} parent=11 // pred_check_branch
        %123 = sbr.rel (%p121) target = $region20
      $region19: #{dual_sep_conv.5} parent=11 // pred_region
        _
      $region20: #{dual_sep_conv.5} parent=11 // pred_fallthru
        _
    $region12: #{dual_sep_conv.5} parent=5 // pred_fallthru
      _
    %p124 = scmp.lt.s32.totalorder %s9, 2
    // Predicated region
    $region21: #{dual_sep_conv.5} parent=5 // pred_check
      %p125 = pneg %p124
    $region22: #{dual_sep_conv.5} parent=5 // pred_check_branch
      %127 = sbr.rel (%p125) target = $region24
    $region23: #{dual_sep_conv.5} parent=5 // pred_region
      // Predicated region
      $region25: #{dual_sep_conv.5} parent=23 // pred_check
        %p128 = pneg %p29
      $region26: #{dual_sep_conv.5} parent=23 // pred_check_branch
        %130 = sbr.rel (%p128) target = $region28
      $region27: #{dual_sep_conv.5} parent=23 // pred_region
        %p131 = scmp.lt.s32.totalorder %s9, 1
        %s132 = scalar_select %p131, %s9, 1
        %s133 = smul.addr %s132, 4
        %s134 = smul.addr %s133, 8
        %s135 = scalar_lea.vmem %s0, %s134
      $region28: #{dual_sep_conv.5} parent=23 // pred_fallthru
        _
    $region24: #{dual_sep_conv.5} parent=5 // pred_fallthru
      _
    %p136 = scmp.le.s32.totalorder 1, %s9
    %p137 = scmp.lt.s32.totalorder %s9, 3
    %p138 = pnand %p136, %p137
    %p139 = pneg %p138
    // Predicated region
    $region29: #{dual_sep_conv.5} parent=5 // pred_check
      _
    $region30: #{dual_sep_conv.5} parent=5 // pred_check_branch
      %141 = sbr.rel (%p138) target = $region32
    $region31: #{dual_sep_conv.5} parent=5 // pred_region
      %s142 = ssub.s32 %s9, 1
      %p143 = scmp.lt.s32.totalorder %s14, 1
      %s144 = scalar_select %p143, %s14, 1
      %s145 = smul.addr %s144, 4
      %s146 = smul.addr %s145, 8
      %s147 = scalar_lea.vmem %s0, %s146
      %p148 = pneg %p35
      %p149 = pneg %p32
      %p150 = pneg %p56
      %p151 = pneg %p53
      %p152 = pneg %p77
      %p153 = pneg %p74
      %p154 = pneg %p103
      %p155 = pneg %p100
      %p156 = scmp.lt.s32.totalorder %s14, 1
      %s157 = scalar_select %p156, %s14, 1
      %s158 = smul.addr %s157, 4
      %s159 = smul.addr %s158, 8
      %s160 = scalar_lea.vmem %s3, %s159
      %p161 = scmp.lt.s32.totalorder %s14, 1
      %s162 = scalar_select %p161, %s14, 1
      %s163 = smul.addr %s162, 4
      %s164 = smul.addr %s163, 8
      %s165 = scalar_lea.vmem %s0, %s164
      %p166 = scmp.lt.s32.totalorder %s14, 1
      %s167 = scalar_select %p166, %s14, 1
      %s168 = smul.addr %s167, 4
      %s169 = smul.addr %s168, 8
      %s170 = scalar_lea.vmem %s3, %s169
      %v171 = vld [vmem:[%s165] sm:$0xff]
      %v172 = vld [vmem:[%s165 + $0x8] sm:$0xff]
      %v173 = vld [vmem:[%s165 + $0x10] sm:$0xff]
      %v174 = vld [vmem:[%s165 + $0x18] sm:$0xff]
      %v175 = vld [vmem:[%s1] sm:$0xff]
      %v176 = vld [vmem:[%s1 + $0x8] sm:$0xff]
      %178 = vset.pattern.permute.xlu0 0
      %179 = vperm.xlu0 %178, %v175
      %v180 = vpop.permute.xlu0 %179
      %183 = vset.pattern.permute.xlu0 0
      %184 = vperm.xlu0 %183, %v176
      %v185 = vpop.permute.xlu0 %184
      %v187 = vmul.f32 %v171, %v180
      %v188 = vmul.f32 %v172, %v180
      %v189 = vmul.f32 %v173, %v185
      %v190 = vmul.f32 %v174, %v185
      %v191 = vld [vmem:[%s2] sm:$0xff]
      %v192 = vld [vmem:[%s2 + $0x8] sm:$0xff]
      %194 = vset.pattern.permute.xlu0 0
      %195 = vperm.xlu0 %194, %v191
      %v196 = vpop.permute.xlu0 %195
      %199 = vset.pattern.permute.xlu0 0
      %200 = vperm.xlu0 %199, %v192
      %v201 = vpop.permute.xlu0 %200
      %v203 = vadd.f32 %v187, %v196
      %v204 = vadd.f32 %v188, %v196
      %v205 = vadd.f32 %v189, %v201
      %v206 = vadd.f32 %v190, %v201
      %207 = vst [vmem:[%s170] sm:$0xff] %v203
      %208 = vst [vmem:[%s170 + $0x8] sm:$0xff] %v204
      %209 = vst [vmem:[%s170 + $0x10] sm:$0xff] %v205
      %210 = vst [vmem:[%s170 + $0x18] sm:$0xff] %v206
      %p211 = scmp.lt.s32.totalorder %s14, 1
      %s212 = scalar_select %p211, %s14, 1
      %s213 = smul.addr %s212, 4
      %s214 = smul.addr %s213, 8
      %s215 = scalar_lea.vmem %s3, %s214
      // Predicated region
      $region33: #{dual_sep_conv.5} parent=31 // pred_check
        %p216 = pneg %p100
      $region34: #{dual_sep_conv.5} parent=31 // pred_check_branch
        %218 = sbr.rel (%p216) target = $region36
      $region35: #{dual_sep_conv.5} parent=31 // pred_region
        _
      $region36: #{dual_sep_conv.5} parent=31 // pred_fallthru
        _
    $region32: #{dual_sep_conv.5} parent=5 // pred_fallthru
      _
    %p219 = scmp.le.s32.totalorder 2, %s9
    // Predicated region
    $region37: #{dual_sep_conv.5} parent=5 // pred_check
      %p220 = pneg %p219
    $region38: #{dual_sep_conv.5} parent=5 // pred_check_branch
      %222 = sbr.rel (%p220) target = $region40
    $region39: #{dual_sep_conv.5} parent=5 // pred_region
      %s223 = ssub.s32 %s9, 2
      // Predicated region
      $region41: #{dual_sep_conv.5} parent=39 // pred_check
        %p224 = pneg %p106
      $region42: #{dual_sep_conv.5} parent=39 // pred_check_branch
        %226 = sbr.rel (%p224) target = $region44
      $region43: #{dual_sep_conv.5} parent=39 // pred_region
        %p227 = scmp.lt.s32.totalorder %s15, 1
        %s228 = scalar_select %p227, %s15, 1
        %s229 = smul.addr %s228, 4
        %s230 = smul.addr %s229, 8
        %s231 = scalar_lea.vmem %s3, %s230
      $region44: #{dual_sep_conv.5} parent=39 // pred_fallthru
        _
    $region40: #{dual_sep_conv.5} parent=5 // pred_fallthru
      _
  $region6: #{dual_sep_conv.5} parent=0 // loop_footer
    %s13 = sadd.s32 1, %s9
  $region7: #{dual_sep_conv.5} parent=0 // loop_footer_branch
    %8 = sbr.rel target = $region3
  $region8: #{dual_sep_conv.5} parent=0 // loop_exit
    _

// kernel: dual_sep_conv.3
$region0: #{dual_sep_conv.3}
  #allocation0 [shape = 'u32[]', space=smem, size = 0x4, offset = 0x4, fixed_abs, tag = 'smem constant byte address 0x4 - core index']
  #allocation1 [shape = 'u32[144,128]{1,0:T(1,128)}', space=vmem, size = 0x12000, scoped, tag = 'internal scratch']
  %s0 = inlined_call_operand.vmem [shape: f32[8,1], index: 0, kind: input, shape index: {}]
  %s1 = inlined_call_operand.vmem [shape: f32[8,1], index: 1, kind: input, shape index: {}]
  %s2 = inlined_call_operand.vmem [shape: f32[8,9], index: 2, kind: input, shape index: {}]
  %s3 = inlined_call_operand.vmem [shape: f32[8,8], index: 3, kind: input, shape index: {}]
  %s4 = inlined_call_operand.vmem [shape: f32[2,8,256], index: 4, kind: input, shape index: {}]
  %s5 = inlined_call_operand.vmem [shape: f32[2,8,256], index: 5, kind: output, shape index: {0}]
  %s6 = inlined_call_operand.vmem [shape: f32[2,8,1], index: 6, kind: output, shape index: {1}]
  %s7 = inlined_call_operand.vmem [shape: f32[2,8,1], index: 7, kind: output, shape index: {2}]
  %8 = xla_tuple %s5, %s6, %s7
  %s9 = sld [smem:[#allocation0]]
  $region69: #{dual_sep_conv.3} parent=0
    _
  %s11 = ssub.s32 1, %s9
  %s12 = scalar_select 0, %s11, %s9
  loop: start=0, step=1, limit=4
  $region2: #{dual_sep_conv.3} parent=0 // loop_pre_header
    _
  $region3: #{dual_sep_conv.3} parent=0 // loop_header
    %s14 = sphi 0, %s18
    %p15 = scmp.ge.s32.totalorder %s14, 4
    %s22 = sphi 0, %s22
    %s24 = sphi 0, %s22
    %s25 = sphi 0, %s24
    %s39 = sphi 0, %s25
    %s43 = sphi 0, %s43
    %s45 = sphi 0, %s43
    %s46 = sphi 0, %s45
    %s60 = sphi 0, %s46
    %s64 = sphi 0, %s64
    %s66 = sphi 0, %s64
    %s67 = sphi 0, %s66
    %s81 = sphi 0, %s67
    %s85 = sphi 0, %s85
    %s87 = sphi 0, %s85
    %s88 = sphi 0, %s87
    %s102 = sphi 0, %s88
    %s108 = sphi 0, %s110
    %s111 = sphi 0, %s108
    %s112 = sphi 0, %s111
    %s128 = sphi 0, %s112
    %s134 = sphi 0, %s136
    %s137 = sphi 0, %s134
    %s138 = sphi 0, %s137
    %s154 = sphi 0, %s138
    %s160 = sphi 0, %s162
    %s163 = sphi 0, %s160
    %s164 = sphi 0, %s163
    %s180 = sphi 0, %s164
    %s186 = sphi 0, %s188
    %s189 = sphi 0, %s186
    %s190 = sphi 0, %s189
    %s206 = sphi 0, %s190
  $region4: #{dual_sep_conv.3} parent=0 // loop_header_branch
    %17 = sbr.rel (%p15) target = $region8
  $region5: #{dual_sep_conv.3} parent=0 // loop_body
    %s19 = ssub.s32 %s14, 1
    %s20 = ssub.s32 %s14, 2
    %s21 = sadd.s32 %s14, 1
    %s23 = sadd.s32 %s22, 1
    %p26 = scmp.eq.s32.totalorder %s14, 1
    %p27 = scmp.ne.s32.totalorder %s22, %s24
    %p28 = scmp.eq.s32.totalorder %s14, 0
    %p29 = por %p27, %p28
    %p30 = scmp.ne.s32.totalorder %s22, %s24
    %p31 = scmp.eq.s32.totalorder %s19, 1
    %p32 = por %p30, %p31
    %p33 = scmp.ne.s32.totalorder %s24, %s25
    %p34 = scmp.eq.s32.totalorder %s19, 0
    %p35 = por %p33, %p34
    %p36 = scmp.ne.s32.totalorder %s24, %s25
    %p37 = scmp.eq.s32.totalorder %s20, 1
    %p38 = por %p36, %p37
    %p40 = scmp.ne.s32.totalorder %s25, %s39
    %p41 = scmp.eq.s32.totalorder %s20, 0
    %p42 = por %p40, %p41
    %s44 = sadd.s32 %s43, 1
    %p47 = scmp.eq.s32.totalorder %s14, 1
    %p48 = scmp.ne.s32.totalorder %s43, %s45
    %p49 = scmp.eq.s32.totalorder %s14, 0
    %p50 = por %p48, %p49
    %p51 = scmp.ne.s32.totalorder %s43, %s45
    %p52 = scmp.eq.s32.totalorder %s19, 1
    %p53 = por %p51, %p52
    %p54 = scmp.ne.s32.totalorder %s45, %s46
    %p55 = scmp.eq.s32.totalorder %s19, 0
    %p56 = por %p54, %p55
    %p57 = scmp.ne.s32.totalorder %s45, %s46
    %p58 = scmp.eq.s32.totalorder %s20, 1
    %p59 = por %p57, %p58
    %p61 = scmp.ne.s32.totalorder %s46, %s60
    %p62 = scmp.eq.s32.totalorder %s20, 0
    %p63 = por %p61, %p62
    %s65 = sadd.s32 %s64, 1
    %p68 = scmp.eq.s32.totalorder %s14, 1
    %p69 = scmp.ne.s32.totalorder %s64, %s66
    %p70 = scmp.eq.s32.totalorder %s14, 0
    %p71 = por %p69, %p70
    %p72 = scmp.ne.s32.totalorder %s64, %s66
    %p73 = scmp.eq.s32.totalorder %s19, 1
    %p74 = por %p72, %p73
    %p75 = scmp.ne.s32.totalorder %s66, %s67
    %p76 = scmp.eq.s32.totalorder %s19, 0
    %p77 = por %p75, %p76
    %p78 = scmp.ne.s32.totalorder %s66, %s67
    %p79 = scmp.eq.s32.totalorder %s20, 1
    %p80 = por %p78, %p79
    %p82 = scmp.ne.s32.totalorder %s67, %s81
    %p83 = scmp.eq.s32.totalorder %s20, 0
    %p84 = por %p82, %p83
    %s86 = sadd.s32 %s85, 1
    %p89 = scmp.eq.s32.totalorder %s14, 1
    %p90 = scmp.ne.s32.totalorder %s85, %s87
    %p91 = scmp.eq.s32.totalorder %s14, 0
    %p92 = por %p90, %p91
    %p93 = scmp.ne.s32.totalorder %s85, %s87
    %p94 = scmp.eq.s32.totalorder %s19, 1
    %p95 = por %p93, %p94
    %p96 = scmp.ne.s32.totalorder %s87, %s88
    %p97 = scmp.eq.s32.totalorder %s19, 0
    %p98 = por %p96, %p97
    %p99 = scmp.ne.s32.totalorder %s87, %s88
    %p100 = scmp.eq.s32.totalorder %s20, 1
    %p101 = por %p99, %p100
    %p103 = scmp.ne.s32.totalorder %s88, %s102
    %p104 = scmp.eq.s32.totalorder %s20, 0
    %p105 = por %p103, %p104
    %s106 = ssub.s32 %s14, %s21
    %p107 = scmp.eq.s32.totalorder %s106, 0
    %s109 = sadd.s32 %s108, 1
    %s110 = scalar_select %p107, %s108, %s109
    %p113 = pneg %p107
    %p114 = scmp.eq.s32.totalorder %s14, 1
    %p115 = por %p113, %p114
    %p116 = scmp.ne.s32.totalorder %s108, %s111
    %p117 = scmp.eq.s32.totalorder %s14, 0
    %p118 = por %p116, %p117
    %p119 = scmp.ne.s32.totalorder %s108, %s111
    %p120 = scmp.eq.s32.totalorder %s19, 1
    %p121 = por %p119, %p120
    %p122 = scmp.ne.s32.totalorder %s111, %s112
    %p123 = scmp.eq.s32.totalorder %s19, 0
    %p124 = por %p122, %p123
    %p125 = scmp.ne.s32.totalorder %s111, %s112
    %p126 = scmp.eq.s32.totalorder %s20, 1
    %p127 = por %p125, %p126
    %p129 = scmp.ne.s32.totalorder %s112, %s128
    %p130 = scmp.eq.s32.totalorder %s20, 0
    %p131 = por %p129, %p130
    %s132 = ssub.s32 %s14, %s21
    %p133 = scmp.eq.s32.totalorder %s132, 0
    %s135 = sadd.s32 %s134, 1
    %s136 = scalar_select %p133, %s134, %s135
    %p139 = pneg %p133
    %p140 = scmp.eq.s32.totalorder %s14, 1
    %p141 = por %p139, %p140
    %p142 = scmp.ne.s32.totalorder %s134, %s137
    %p143 = scmp.eq.s32.totalorder %s14, 0
    %p144 = por %p142, %p143
    %p145 = scmp.ne.s32.totalorder %s134, %s137
    %p146 = scmp.eq.s32.totalorder %s19, 1
    %p147 = por %p145, %p146
    %p148 = scmp.ne.s32.totalorder %s137, %s138
    %p149 = scmp.eq.s32.totalorder %s19, 0
    %p150 = por %p148, %p149
    %p151 = scmp.ne.s32.totalorder %s137, %s138
    %p152 = scmp.eq.s32.totalorder %s20, 1
    %p153 = por %p151, %p152
    %p155 = scmp.ne.s32.totalorder %s138, %s154
    %p156 = scmp.eq.s32.totalorder %s20, 0
    %p157 = por %p155, %p156
    %s158 = ssub.s32 %s14, %s21
    %p159 = scmp.eq.s32.totalorder %s158, 0
    %s161 = sadd.s32 %s160, 1
    %s162 = scalar_select %p159, %s160, %s161
    %p165 = pneg %p159
    %p166 = scmp.eq.s32.totalorder %s14, 1
    %p167 = por %p165, %p166
    %p168 = scmp.ne.s32.totalorder %s160, %s163
    %p169 = scmp.eq.s32.totalorder %s14, 0
    %p170 = por %p168, %p169
    %p171 = scmp.ne.s32.totalorder %s160, %s163
    %p172 = scmp.eq.s32.totalorder %s19, 1
    %p173 = por %p171, %p172
    %p174 = scmp.ne.s32.totalorder %s163, %s164
    %p175 = scmp.eq.s32.totalorder %s19, 0
    %p176 = por %p174, %p175
    %p177 = scmp.ne.s32.totalorder %s163, %s164
    %p178 = scmp.eq.s32.totalorder %s20, 1
    %p179 = por %p177, %p178
    %p181 = scmp.ne.s32.totalorder %s164, %s180
    %p182 = scmp.eq.s32.totalorder %s20, 0
    %p183 = por %p181, %p182
    %s184 = ssub.s32 %s14, %s21
    %p185 = scmp.eq.s32.totalorder %s184, 0
    %s187 = sadd.s32 %s186, 1
    %s188 = scalar_select %p185, %s186, %s187
    %p191 = pneg %p185
    %p192 = scmp.eq.s32.totalorder %s14, 1
    %p193 = por %p191, %p192
    %p194 = scmp.ne.s32.totalorder %s186, %s189
    %p195 = scmp.eq.s32.totalorder %s14, 0
    %p196 = por %p194, %p195
    %p197 = scmp.ne.s32.totalorder %s186, %s189
    %p198 = scmp.eq.s32.totalorder %s19, 1
    %p199 = por %p197, %p198
    %p200 = scmp.ne.s32.totalorder %s189, %s190
    %p201 = scmp.eq.s32.totalorder %s19, 0
    %p202 = por %p200, %p201
    %p203 = scmp.ne.s32.totalorder %s189, %s190
    %p204 = scmp.eq.s32.totalorder %s20, 1
    %p205 = por %p203, %p204
    %p207 = scmp.ne.s32.totalorder %s190, %s206
    %p208 = scmp.eq.s32.totalorder %s20, 0
    %p209 = por %p207, %p208
    %p210 = scmp.le.s32.totalorder 1, %s14
    %p211 = scmp.lt.s32.totalorder %s14, 3
    %p212 = pnand %p210, %p211
    %p213 = pneg %p212
    // Predicated region
    $region9: #{dual_sep_conv.3} parent=5 // pred_check
      _
    $region10: #{dual_sep_conv.3} parent=5 // pred_check_branch
      %215 = sbr.rel (%p212) target = $region12
    $region11: #{dual_sep_conv.3} parent=5 // pred_region
      %s216 = ssub.s32 %s14, 1
      // Predicated region
      $region13: #{dual_sep_conv.3} parent=11 // pred_check
        %p217 = pneg %p35
      $region14: #{dual_sep_conv.3} parent=11 // pred_check_branch
        %219 = sbr.rel (%p217) target = $region16
      $region15: #{dual_sep_conv.3} parent=11 // pred_region
        _
      $region16: #{dual_sep_conv.3} parent=11 // pred_fallthru
        _
      // Predicated region
      $region17: #{dual_sep_conv.3} parent=11 // pred_check
        %p220 = pneg %p56
      $region18: #{dual_sep_conv.3} parent=11 // pred_check_branch
        %222 = sbr.rel (%p220) target = $region20
      $region19: #{dual_sep_conv.3} parent=11 // pred_region
        _
      $region20: #{dual_sep_conv.3} parent=11 // pred_fallthru
        _
      // Predicated region
      $region21: #{dual_sep_conv.3} parent=11 // pred_check
        %p223 = pneg %p77
      $region22: #{dual_sep_conv.3} parent=11 // pred_check_branch
        %225 = sbr.rel (%p223) target = $region24
      $region23: #{dual_sep_conv.3} parent=11 // pred_region
        _
      $region24: #{dual_sep_conv.3} parent=11 // pred_fallthru
        _
      // Predicated region
      $region25: #{dual_sep_conv.3} parent=11 // pred_check
        %p226 = pneg %p98
      $region26: #{dual_sep_conv.3} parent=11 // pred_check_branch
        %228 = sbr.rel (%p226) target = $region28
      $region27: #{dual_sep_conv.3} parent=11 // pred_region
        _
      $region28: #{dual_sep_conv.3} parent=11 // pred_fallthru
        _
    $region12: #{dual_sep_conv.3} parent=5 // pred_fallthru
      _
    %p229 = scmp.lt.s32.totalorder %s14, 2
    // Predicated region
    $region29: #{dual_sep_conv.3} parent=5 // pred_check
      %p230 = pneg %p229
    $region30: #{dual_sep_conv.3} parent=5 // pred_check_branch
      %232 = sbr.rel (%p230) target = $region32
    $region31: #{dual_sep_conv.3} parent=5 // pred_region
      // Predicated region
      $region33: #{dual_sep_conv.3} parent=31 // pred_check
        %p233 = pneg %p118
      $region34: #{dual_sep_conv.3} parent=31 // pred_check_branch
        %235 = sbr.rel (%p233) target = $region36
      $region35: #{dual_sep_conv.3} parent=31 // pred_region
        %p236 = scmp.lt.s32.totalorder %s14, 1
        %s237 = scalar_select %p236, %s14, 1
        %s238 = smul.addr %s237, 2
        %s239 = smul.addr %s238, 8
        %s240 = scalar_lea.vmem %s4, %s239
      $region36: #{dual_sep_conv.3} parent=31 // pred_fallthru
        _
    $region32: #{dual_sep_conv.3} parent=5 // pred_fallthru
      _
    %p241 = scmp.le.s32.totalorder 1, %s14
    %p242 = scmp.lt.s32.totalorder %s14, 3
    %p243 = pnand %p241, %p242
    %p244 = pneg %p243
    // Predicated region
    $region37: #{dual_sep_conv.3} parent=5 // pred_check
      _
    $region38: #{dual_sep_conv.3} parent=5 // pred_check_branch
      %246 = sbr.rel (%p243) target = $region40
    $region39: #{dual_sep_conv.3} parent=5 // pred_region
      %s247 = ssub.s32 %s14, 1
      %p248 = pneg %p35
      %p249 = pneg %p32
      %p250 = pneg %p56
      %p251 = pneg %p53
      %p252 = pneg %p77
      %p253 = pneg %p74
      %p254 = pneg %p98
      %p255 = pneg %p95
      %p256 = scmp.lt.s32.totalorder %s19, 1
      %s257 = scalar_select %p256, %s19, 1
      %s258 = smul.addr %s257, 2
      %s259 = smul.addr %s258, 8
      %s260 = scalar_lea.vmem %s4, %s259
      %p261 = pneg %p124
      %p262 = pneg %p121
      %p263 = pneg %p150
      %p264 = pneg %p147
      %p265 = scmp.lt.s32.totalorder %s19, 1
      %s266 = scalar_select %p265, %s19, 1
      %s267 = smul.addr %s266, 2
      %s268 = smul.addr %s267, 8
      %s269 = scalar_lea.vmem %s5, %s268
      %p270 = pneg %p176
      %p271 = pneg %p173
      %p272 = scmp.lt.s32.totalorder %s19, 1
      %s273 = scalar_select %p272, %s19, 1
      %s274 = smul.addr %s273, 8
      %s275 = scalar_lea.vmem %s6, %s274
      %p276 = pneg %p202
      %p277 = pneg %p199
      %p278 = scmp.lt.s32.totalorder %s19, 1
      %s279 = scalar_select %p278, %s19, 1
      %s280 = smul.addr %s279, 8
      %s281 = scalar_lea.vmem %s7, %s280
      %p282 = scmp.lt.s32.totalorder %s19, 1
      %s283 = scalar_select %p282, %s19, 1
      %s284 = smul.addr %s283, 2
      %s285 = smul.addr %s284, 8
      %s286 = scalar_lea.vmem %s4, %s285
      %p287 = scmp.lt.s32.totalorder %s19, 1
      %s288 = scalar_select %p287, %s19, 1
      %s289 = smul.addr %s288, 2
      %s290 = smul.addr %s289, 8
      %s291 = scalar_lea.vmem %s5, %s290
      %p292 = scmp.lt.s32.totalorder %s19, 1
      %s293 = scalar_select %p292, %s19, 1
      %s294 = smul.addr %s293, 8
      %s295 = scalar_lea.vmem %s6, %s294
      %p296 = scmp.lt.s32.totalorder %s19, 1
      %s297 = scalar_select %p296, %s19, 1
      %s298 = smul.addr %s297, 8
      %s299 = scalar_lea.vmem %s7, %s298
      %v300 = vld [vmem:[%s286] sm:$0xff]
      %v301 = vld [vmem:[%s286 + $0x8] sm:$0xff]
      %v302 = vld [vmem:[%s0] sm:$0xff]
      %304 = vset.pattern.permute.xlu0 0
      %305 = vperm.xlu0 %304, %v302
      %v306 = vpop.permute.xlu0 %305
      %v308 = vmul.f32 %v300, %v306
      %v309 = vmul.f32 %v301, %v306
      %v310 = vld [vmem:[%s1] sm:$0xff]
      %312 = vset.pattern.permute.xlu0 0
      %313 = vperm.xlu0 %312, %v310
      %v314 = vpop.permute.xlu0 %313
      %v316 = vadd.f32 %v308, %v314
      %v317 = vadd.f32 %v309, %v314
      %v318 = vmax.f32 %v316, 0.0
      %v319 = vmax.f32 %v317, 0.0
      %322 = vrot.lane.b32.xlu0 %v318, 17
      %v323 = vpop.permute.xlu0 %322
      %324 = vrot.lane.b32.xlu0 %v319, 17
      %v325 = vpop.permute.xlu0 %324
      %vm326 = vcmask 138240
      %v327 = vsel %vm326, %v323, %v325
      %v331 = vsel %vm326, 0.0, %v323
      %v332 = vsel %vm326, %v325, 0.0
      %v333 = vlaneseq
      %v334 = vand.u32 %v333, 127
      %v335 = vadd.s32 %v334, 128
      %vm336 = vcmp.lt.s32.totalorder %v334, 0
      %v337 = vsub.s32 0, %v334
      %v338 = vsel %vm336, %v337, %v334
      %v339 = vshrl.u32 %v338, 4
      %v340 = vand.u32 %v338, 15
      %v341 = vsub.s32 0, %v340
      %v342 = vsel %vm336, %v341, %v340
      %vm343 = vcmp.lt.s32.totalorder %v335, 0
      %v344 = vsub.s32 0, %v335
      %v345 = vsel %vm343, %v344, %v335
      %v346 = vshrl.u32 %v345, 4
      %v347 = vand.u32 %v345, 15
      %v348 = vsub.s32 0, %v347
      %v349 = vsel %vm343, %v348, %v347
      %vm350 = vcmp.ne.s32.totalorder %v342, 0
      %vm351 = vcmp.ne.s32.totalorder %v349, 0
      %vm352 = vcmp.lt.s32.totalorder %v342, 0
      %vm353 = vcmp.lt.s32.totalorder %v349, 0
      %vm354 = vmand %vm352, %vm350
      %vm355 = vmand %vm353, %vm351
      %v356 = vadd.s32 %v342, 16
      %v357 = vadd.s32 %v349, 16
      %v358 = vsel %vm354, %v356, %v342
      %v359 = vsel %vm355, %v357, %v349
      %vm360 = vcmp.ge.s32.totalorder %v358, 1
      %vm361 = vcmp.ge.s32.totalorder %v359, 1
      %vm362 = vcmp.lt.s32.totalorder %v358, 15
      %vm363 = vcmp.lt.s32.totalorder %v359, 15
      %v364 = vsel %vm360, 1, 0
      %v365 = vsel %vm361, 1, 0
      %vm366 = vcmp.eq.s32.totalorder %v364, 1
      %vm367 = vcmp.eq.s32.totalorder %v365, 1
      %v368 = vsel %vm366, %v331, 0.0
      %v369 = vsel %vm367, %v327, 0.0
      %v370 = vld [vmem:[%s2] sm:$0xff]
      %372 = vset.pattern.permute.xlu0 0
      %373 = vperm.xlu0 %372, %v370
      %v374 = vpop.permute.xlu0 %373
      %v376 = vmul.f32 %v368, %v374
      %v377 = vmul.f32 %v369, %v374
      %v378 = vadd.f32 %v376, 0.0
      %v379 = vadd.f32 %v377, 0.0
      %380 = vset.pattern.permute.xlu0 1
      %381 = vperm.xlu0 %380, %v370
      %v382 = vpop.permute.xlu0 %381
      %v384 = vmul.f32 %v331, %v382
      %v385 = vmul.f32 %v327, %v382
      %v386 = vmul.f32 %v332, %v382
      %390 = vrot.lane.b32.xlu0 %v384, 127
      %v391 = vpop.permute.xlu0 %390
      %392 = vrot.lane.b32.xlu0 %v385, 127
      %v393 = vpop.permute.xlu0 %392
      %394 = vrot.lane.b32.xlu0 %v386, 127
      %v395 = vpop.permute.xlu0 %394
      %vm396 = vcmask 1039360
      %v397 = vsel %vm396, %v391, %v393
      %v398 = vsel %vm396, %v393, %v395
      %v401 = vadd.f32 %v378, %v397
      %v402 = vadd.f32 %v379, %v398
      %v403 = vsel %vm362, 1, 0
      %v404 = vsel %vm363, 1, 0
      %vm405 = vcmp.eq.s32.totalorder %v403, 1
      %vm406 = vcmp.eq.s32.totalorder %v404, 1
      %409 = vrot.lane.b32.xlu0 %v331, 126
      %v410 = vpop.permute.xlu0 %409
      %411 = vrot.lane.b32.xlu0 %v327, 126
      %v412 = vpop.permute.xlu0 %411
      %413 = vrot.lane.b32.xlu0 %v332, 126
      %v414 = vpop.permute.xlu0 %413
      %vm415 = vcmask 1031168
      %v416 = vsel %vm415, %v410, %v412
      %v417 = vsel %vm415, %v412, %v414
      %v420 = vsel %vm405, %v416, 0.0
      %v421 = vsel %vm406, %v417, 0.0
      %422 = vset.pattern.permute.xlu0 2
      %423 = vperm.xlu0 %422, %v370
      %v424 = vpop.permute.xlu0 %423
      %v426 = vmul.f32 %v420, %v424
      %v427 = vmul.f32 %v421, %v424
      %v428 = vadd.f32 %v401, %v426
      %v429 = vadd.f32 %v402, %v427
      %430 = vrot.lane.b32.xlu0 %v331, 112
      %v431 = vpop.permute.xlu0 %430
      %432 = vrot.lane.b32.xlu0 %v327, 112
      %v433 = vpop.permute.xlu0 %432
      %434 = vrot.lane.b32.xlu0 %v332, 112
      %v435 = vpop.permute.xlu0 %434
      %vm436 = vcmask 916480
      %v437 = vsel %vm436, %v431, %v433
      %v438 = vsel %vm436, %v433, %v435
      %v441 = vsel %vm366, %v437, 0.0
      %v442 = vsel %vm367, %v438, 0.0
      %443 = vset.pattern.permute.xlu0 3
      %444 = vperm.xlu0 %443, %v370
      %v445 = vpop.permute.xlu0 %444
      %v447 = vmul.f32 %v441, %v445
      %v448 = vmul.f32 %v442, %v445
      %v449 = vadd.f32 %v428, %v447
      %v450 = vadd.f32 %v429, %v448
      %451 = vset.pattern.permute.xlu0 4
      %452 = vperm.xlu0 %451, %v370
      %v453 = vpop.permute.xlu0 %452
      %v455 = vmul.f32 %v331, %v453
      %v456 = vmul.f32 %v327, %v453
      %v457 = vmul.f32 %v332, %v453
      %461 = vrot.lane.b32.xlu0 %v455, 111
      %v462 = vpop.permute.xlu0 %461
      %463 = vrot.lane.b32.xlu0 %v456, 111
      %v464 = vpop.permute.xlu0 %463
      %465 = vrot.lane.b32.xlu0 %v457, 111
      %v466 = vpop.permute.xlu0 %465
      %vm467 = vcmask 908288
      %v468 = vsel %vm467, %v462, %v464
      %v469 = vsel %vm467, %v464, %v466
      %v472 = vadd.f32 %v449, %v468
      %v473 = vadd.f32 %v450, %v469
      %474 = vrot.lane.b32.xlu0 %v331, 110
      %v475 = vpop.permute.xlu0 %474
      %476 = vrot.lane.b32.xlu0 %v327, 110
      %v477 = vpop.permute.xlu0 %476
      %478 = vrot.lane.b32.xlu0 %v332, 110
      %v479 = vpop.permute.xlu0 %478
      %vm480 = vcmask 900096
      %v481 = vsel %vm480, %v475, %v477
      %v482 = vsel %vm480, %v477, %v479
      %v485 = vsel %vm405, %v481, 0.0
      %v486 = vsel %vm406, %v482, 0.0
      %487 = vset.pattern.permute.xlu0 5
      %488 = vperm.xlu0 %487, %v370
      %v489 = vpop.permute.xlu0 %488
      %v491 = vmul.f32 %v485, %v489
      %v492 = vmul.f32 %v486, %v489
      %v493 = vadd.f32 %v472, %v491
      %v494 = vadd.f32 %v473, %v492
      %495 = vrot.lane.b32.xlu0 %v331, 96
      %v496 = vpop.permute.xlu0 %495
      %497 = vrot.lane.b32.xlu0 %v327, 96
      %v498 = vpop.permute.xlu0 %497
      %499 = vrot.lane.b32.xlu0 %v332, 96
      %v500 = vpop.permute.xlu0 %499
      %vm501 = vcmask 785408
      %v502 = vsel %vm501, %v496, %v498
      %v503 = vsel %vm501, %v498, %v500
      %v506 = vsel %vm366, %v502, 0.0
      %v507 = vsel %vm367, %v503, 0.0
      %508 = vset.pattern.permute.xlu0 6
      %509 = vperm.xlu0 %508, %v370
      %v510 = vpop.permute.xlu0 %509
      %v512 = vmul.f32 %v506, %v510
      %v513 = vmul.f32 %v507, %v510
      %v514 = vadd.f32 %v493, %v512
      %v515 = vadd.f32 %v494, %v513
      %516 = vset.pattern.permute.xlu0 7
      %517 = vperm.xlu0 %516, %v370
      %v518 = vpop.permute.xlu0 %517
      %v520 = vmul.f32 %v331, %v518
      %v521 = vmul.f32 %v327, %v518
      %v522 = vmul.f32 %v332, %v518
      %526 = vrot.lane.b32.xlu0 %v520, 95
      %v527 = vpop.permute.xlu0 %526
      %528 = vrot.lane.b32.xlu0 %v521, 95
      %v529 = vpop.permute.xlu0 %528
      %530 = vrot.lane.b32.xlu0 %v522, 95
      %v531 = vpop.permute.xlu0 %530
      %vm532 = vcmask 777216
      %v533 = vsel %vm532, %v527, %v529
      %v534 = vsel %vm532, %v529, %v531
      %v537 = vadd.f32 %v514, %v533
      %v538 = vadd.f32 %v515, %v534
      %539 = vrot.lane.b32.xlu0 %v331, 94
      %v540 = vpop.permute.xlu0 %539
      %541 = vrot.lane.b32.xlu0 %v327, 94
      %v542 = vpop.permute.xlu0 %541
      %543 = vrot.lane.b32.xlu0 %v332, 94
      %v544 = vpop.permute.xlu0 %543
      %vm545 = vcmask 769024
      %v546 = vsel %vm545, %v540, %v542
      %v547 = vsel %vm545, %v542, %v544
      %v550 = vsel %vm405, %v546, 0.0
      %v551 = vsel %vm406, %v547, 0.0
      %552 = vset.pattern.permute.xlu0 8
      %553 = vperm.xlu0 %552, %v370
      %v554 = vpop.permute.xlu0 %553
      %v556 = vmul.f32 %v550, %v554
      %v557 = vmul.f32 %v551, %v554
      %v558 = vadd.f32 %v537, %v556
      %v559 = vadd.f32 %v538, %v557
      %v560 = vld [vmem:[%s3] sm:$0xff]
      %vm561 = vcmask 64512
      %v563 = vsel %vm561, %v560, 0
      %565 = vmatprep.subr.mxu0 %v559
      %566 = vmatpush1.msra.mxu0 %v558
      %567 = vmatprep.subr.mxu0 0.0
      %568 = vmatpush1.msra.mxu0 0.0
      %569 = vmatprep.subr.mxu0 0.0
      %570 = vmatpush1.msra.mxu0 0.0
      %571 = vmatprep.subr.mxu0 0.0
      %572 = vmatpush1.msra.mxu0 0.0
      %573 = vmatprep.subr.mxu0 0.0
      %574 = vmatpush1.msra.mxu0 0.0
      %575 = vmatprep.subr.mxu0 0.0
      %576 = vmatpush1.msra.mxu0 0.0
      %577 = vmatprep.subr.mxu0 0.0
      %578 = vmatpush1.msra.mxu0 0.0
      %579 = vmatprep.subr.mxu0 0.0
      %580 = vmatpush1.msra.mxu0 0.0
      %581 = vmatprep.subr.mxu0 0.0
      %582 = vmatpush1.msra.mxu0 0.0
      %583 = vmatprep.subr.mxu0 0.0
      %584 = vmatpush1.msra.mxu0 0.0
      %585 = vmatprep.subr.mxu0 0.0
      %586 = vmatpush1.msra.mxu0 0.0
      %587 = vmatprep.subr.mxu0 0.0
      %588 = vmatpush1.msra.mxu0 0.0
      %589 = vmatprep.subr.mxu0 0.0
      %590 = vmatpush1.msra.mxu0 0.0
      %591 = vmatprep.subr.mxu0 0.0
      %592 = vmatpush1.msra.mxu0 0.0
      %593 = vmatprep.subr.mxu0 0.0
      %594 = vmatpush1.msra.mxu0 0.0
      %595 = vmatprep.subr.mxu0 0.0
      %596 = vmatpush1.msra.mxu0 0.0
      %597 = vmatprep.subr.mxu0 0.0
      %598 = vmatpush1.msra.mxu0 0.0
      %599 = vmatprep.subr.mxu0 0.0
      %600 = vmatpush1.msra.mxu0 0.0
      %601 = vmatprep.subr.mxu0 0.0
      %602 = vmatpush1.msra.mxu0 0.0
      %603 = vmatprep.subr.mxu0 0.0
      %604 = vmatpush1.msra.mxu0 0.0
      %605 = vmatprep.subr.mxu0 0.0
      %606 = vmatpush1.msra.mxu0 0.0
      %607 = vmatprep.subr.mxu0 0.0
      %608 = vmatpush1.msra.mxu0 0.0
      %609 = vmatprep.subr.mxu0 0.0
      %610 = vmatpush1.msra.mxu0 0.0
      %611 = vmatprep.subr.mxu0 0.0
      %612 = vmatpush1.msra.mxu0 0.0
      %613 = vmatprep.subr.mxu0 0.0
      %614 = vmatpush1.msra.mxu0 0.0
      %615 = vmatprep.subr.mxu0 0.0
      %616 = vmatpush1.msra.mxu0 0.0
      %617 = vmatprep.subr.mxu0 0.0
      %618 = vmatpush1.msra.mxu0 0.0
      %619 = vmatprep.subr.mxu0 0.0
      %620 = vmatpush1.msra.mxu0 0.0
      %621 = vmatprep.subr.mxu0 0.0
      %622 = vmatpush1.msra.mxu0 0.0
      %623 = vmatprep.subr.mxu0 0.0
      %624 = vmatpush1.msra.mxu0 0.0
      %625 = vmatprep.subr.mxu0 0.0
      %626 = vmatpush1.msra.mxu0 0.0
      %627 = vmatprep.subr.mxu0 0.0
      %628 = vmatpush1.msra.mxu0 0.0
      %629 = vmatprep.mubr.f32.mxu0 0.0
      %630 = vmatmul.mubr.f32.gmra.mrb[0].mxu0 %v563
      %v631 = vpop.f32.mrb[0].mxu0
      %v632 = vadd.f32 0.0, %v631
      %v633 = vpop.f32.mrb[0].mxu0
      %v634 = vadd.f32 0.0, %v633
      %635 = vdwg.mxu0
      %636 = vst [vmem:[%s291] sm:$0xff] %v632
      %637 = vst [vmem:[%s291 + $0x8] sm:$0xff] %v634
      %v638 = vadd.f32 %v632, %v634
      %639 = vadd.xlane.f32.xlu0 %v638
      %v640 = vpop.xlane.xlu0 %639
      %vm641 = vcmask 7168
      %642 = vst.msk [vmem:[%s295] sm:$0xff] %vm641, %v640
      %v643 = vmul.f32 %v632, %v632
      %v644 = vmul.f32 %v634, %v634
      %v645 = vadd.f32 %v643, %v644
      %646 = vadd.xlane.f32.xlu0 %v645
      %v647 = vpop.xlane.xlu0 %646
      %648 = vst.msk [vmem:[%s299] sm:$0xff] %vm641, %v647
      %p649 = scmp.lt.s32.totalorder %s19, 1
      %s650 = scalar_select %p649, %s19, 1
      %s651 = smul.addr %s650, 2
      %s652 = smul.addr %s651, 8
      %s653 = scalar_lea.vmem %s5, %s652
      %p654 = scmp.lt.s32.totalorder %s19, 1
      %s655 = scalar_select %p654, %s19, 1
      %s656 = smul.addr %s655, 8
      %s657 = scalar_lea.vmem %s6, %s656
      %p658 = scmp.lt.s32.totalorder %s19, 1
      %s659 = scalar_select %p658, %s19, 1
      %s660 = smul.addr %s659, 8
      %s661 = scalar_lea.vmem %s7, %s660
      // Predicated region
      $region41: #{dual_sep_conv.3} parent=39 // pred_check
        %p662 = pneg %p147
      $region42: #{dual_sep_conv.3} parent=39 // pred_check_branch
        %664 = sbr.rel (%p662) target = $region44
      $region43: #{dual_sep_conv.3} parent=39 // pred_region
        _
      $region44: #{dual_sep_conv.3} parent=39 // pred_fallthru
        _
      // Predicated region
      $region45: #{dual_sep_conv.3} parent=39 // pred_check
        %p665 = pneg %p173
      $region46: #{dual_sep_conv.3} parent=39 // pred_check_branch
        %667 = sbr.rel (%p665) target = $region48
      $region47: #{dual_sep_conv.3} parent=39 // pred_region
        _
      $region48: #{dual_sep_conv.3} parent=39 // pred_fallthru
        _
      // Predicated region
      $region49: #{dual_sep_conv.3} parent=39 // pred_check
        %p668 = pneg %p199
      $region50: #{dual_sep_conv.3} parent=39 // pred_check_branch
        %670 = sbr.rel (%p668) target = $region52
      $region51: #{dual_sep_conv.3} parent=39 // pred_region
        _
      $region52: #{dual_sep_conv.3} parent=39 // pred_fallthru
        _
    $region40: #{dual_sep_conv.3} parent=5 // pred_fallthru
      _
    %p671 = scmp.le.s32.totalorder 2, %s14
    // Predicated region
    $region53: #{dual_sep_conv.3} parent=5 // pred_check
      %p672 = pneg %p671
    $region54: #{dual_sep_conv.3} parent=5 // pred_check_branch
      %674 = sbr.rel (%p672) target = $region56
    $region55: #{dual_sep_conv.3} parent=5 // pred_region
      %s675 = ssub.s32 %s14, 2
      // Predicated region
      $region57: #{dual_sep_conv.3} parent=55 // pred_check
        %p676 = pneg %p153
      $region58: #{dual_sep_conv.3} parent=55 // pred_check_branch
        %678 = sbr.rel (%p676) target = $region60
      $region59: #{dual_sep_conv.3} parent=55 // pred_region
        %p679 = scmp.lt.s32.totalorder %s20, 1
        %s680 = scalar_select %p679, %s20, 1
        %s681 = smul.addr %s680, 2
        %s682 = smul.addr %s681, 8
        %s683 = scalar_lea.vmem %s5, %s682
      $region60: #{dual_sep_conv.3} parent=55 // pred_fallthru
        _
      // Predicated region
      $region61: #{dual_sep_conv.3} parent=55 // pred_check
        %p684 = pneg %p179
      $region62: #{dual_sep_conv.3} parent=55 // pred_check_branch
        %686 = sbr.rel (%p684) target = $region64
      $region63: #{dual_sep_conv.3} parent=55 // pred_region
        %p687 = scmp.lt.s32.totalorder %s20, 1
        %s688 = scalar_select %p687, %s20, 1
        %s689 = smul.addr %s688, 8
        %s690 = scalar_lea.vmem %s6, %s689
      $region64: #{dual_sep_conv.3} parent=55 // pred_fallthru
        _
      // Predicated region
      $region65: #{dual_sep_conv.3} parent=55 // pred_check
        %p691 = pneg %p205
      $region66: #{dual_sep_conv.3} parent=55 // pred_check_branch
        %693 = sbr.rel (%p691) target = $region68
      $region67: #{dual_sep_conv.3} parent=55 // pred_region
        %p694 = scmp.lt.s32.totalorder %s20, 1
        %s695 = scalar_select %p694, %s20, 1
        %s696 = smul.addr %s695, 8
        %s697 = scalar_lea.vmem %s7, %s696
      $region68: #{dual_sep_conv.3} parent=55 // pred_fallthru
        _
    $region56: #{dual_sep_conv.3} parent=5 // pred_fallthru
      _
  $region6: #{dual_sep_conv.3} parent=0 // loop_footer
    %s18 = sadd.s32 1, %s14
  $region7: #{dual_sep_conv.3} parent=0 // loop_footer_branch
    %13 = sbr.rel target = $region3
  $region8: #{dual_sep_conv.3} parent=0 // loop_exit
    _

// kernel: dual_sep_conv.4
$region0: #{dual_sep_conv.4}
  #allocation0 [shape = 'u32[]', space=smem, size = 0x4, offset = 0x4, fixed_abs, tag = 'smem constant byte address 0x4 - core index']
  #allocation1 [shape = 'u32[144,128]{1,0:T(1,128)}', space=vmem, size = 0x12000, scoped, tag = 'internal scratch']
  %s0 = inlined_call_operand.vmem [shape: f32[8,1], index: 0, kind: input, shape index: {}]
  %s1 = inlined_call_operand.vmem [shape: f32[8,1], index: 1, kind: input, shape index: {}]
  %s2 = inlined_call_operand.vmem [shape: f32[8,9], index: 2, kind: input, shape index: {}]
  %s3 = inlined_call_operand.vmem [shape: f32[16,8], index: 3, kind: input, shape index: {}]
  %s4 = inlined_call_operand.vmem [shape: f32[2,8,256], index: 4, kind: input, shape index: {}]
  %s5 = inlined_call_operand.vmem [shape: f32[2,16,256], index: 5, kind: output, shape index: {0}]
  %s6 = inlined_call_operand.vmem [shape: f32[2,16,1], index: 6, kind: output, shape index: {1}]
  %s7 = inlined_call_operand.vmem [shape: f32[2,16,1], index: 7, kind: output, shape index: {2}]
  %8 = xla_tuple %s5, %s6, %s7
  %s9 = sld [smem:[#allocation0]]
  $region69: #{dual_sep_conv.4} parent=0
    _
  %s11 = ssub.s32 1, %s9
  %s12 = scalar_select 0, %s11, %s9
  loop: start=0, step=1, limit=4
  $region2: #{dual_sep_conv.4} parent=0 // loop_pre_header
    _
  $region3: #{dual_sep_conv.4} parent=0 // loop_header
    %s14 = sphi 0, %s18
    %p15 = scmp.ge.s32.totalorder %s14, 4
    %s22 = sphi 0, %s22
    %s24 = sphi 0, %s22
    %s25 = sphi 0, %s24
    %s39 = sphi 0, %s25
    %s43 = sphi 0, %s43
    %s45 = sphi 0, %s43
    %s46 = sphi 0, %s45
    %s60 = sphi 0, %s46
    %s64 = sphi 0, %s64
    %s66 = sphi 0, %s64
    %s67 = sphi 0, %s66
    %s81 = sphi 0, %s67
    %s85 = sphi 0, %s85
    %s87 = sphi 0, %s85
    %s88 = sphi 0, %s87
    %s102 = sphi 0, %s88
    %s108 = sphi 0, %s110
    %s111 = sphi 0, %s108
    %s112 = sphi 0, %s111
    %s128 = sphi 0, %s112
    %s134 = sphi 0, %s136
    %s137 = sphi 0, %s134
    %s138 = sphi 0, %s137
    %s154 = sphi 0, %s138
    %s160 = sphi 0, %s162
    %s163 = sphi 0, %s160
    %s164 = sphi 0, %s163
    %s180 = sphi 0, %s164
    %s186 = sphi 0, %s188
    %s189 = sphi 0, %s186
    %s190 = sphi 0, %s189
    %s206 = sphi 0, %s190
  $region4: #{dual_sep_conv.4} parent=0 // loop_header_branch
    %17 = sbr.rel (%p15) target = $region8
  $region5: #{dual_sep_conv.4} parent=0 // loop_body
    %s19 = ssub.s32 %s14, 1
    %s20 = ssub.s32 %s14, 2
    %s21 = sadd.s32 %s14, 1
    %s23 = sadd.s32 %s22, 1
    %p26 = scmp.eq.s32.totalorder %s14, 1
    %p27 = scmp.ne.s32.totalorder %s22, %s24
    %p28 = scmp.eq.s32.totalorder %s14, 0
    %p29 = por %p27, %p28
    %p30 = scmp.ne.s32.totalorder %s22, %s24
    %p31 = scmp.eq.s32.totalorder %s19, 1
    %p32 = por %p30, %p31
    %p33 = scmp.ne.s32.totalorder %s24, %s25
    %p34 = scmp.eq.s32.totalorder %s19, 0
    %p35 = por %p33, %p34
    %p36 = scmp.ne.s32.totalorder %s24, %s25
    %p37 = scmp.eq.s32.totalorder %s20, 1
    %p38 = por %p36, %p37
    %p40 = scmp.ne.s32.totalorder %s25, %s39
    %p41 = scmp.eq.s32.totalorder %s20, 0
    %p42 = por %p40, %p41
    %s44 = sadd.s32 %s43, 1
    %p47 = scmp.eq.s32.totalorder %s14, 1
    %p48 = scmp.ne.s32.totalorder %s43, %s45
    %p49 = scmp.eq.s32.totalorder %s14, 0
    %p50 = por %p48, %p49
    %p51 = scmp.ne.s32.totalorder %s43, %s45
    %p52 = scmp.eq.s32.totalorder %s19, 1
    %p53 = por %p51, %p52
    %p54 = scmp.ne.s32.totalorder %s45, %s46
    %p55 = scmp.eq.s32.totalorder %s19, 0
    %p56 = por %p54, %p55
    %p57 = scmp.ne.s32.totalorder %s45, %s46
    %p58 = scmp.eq.s32.totalorder %s20, 1
    %p59 = por %p57, %p58
    %p61 = scmp.ne.s32.totalorder %s46, %s60
    %p62 = scmp.eq.s32.totalorder %s20, 0
    %p63 = por %p61, %p62
    %s65 = sadd.s32 %s64, 1
    %p68 = scmp.eq.s32.totalorder %s14, 1
    %p69 = scmp.ne.s32.totalorder %s64, %s66
    %p70 = scmp.eq.s32.totalorder %s14, 0
    %p71 = por %p69, %p70
    %p72 = scmp.ne.s32.totalorder %s64, %s66
    %p73 = scmp.eq.s32.totalorder %s19, 1
    %p74 = por %p72, %p73
    %p75 = scmp.ne.s32.totalorder %s66, %s67
    %p76 = scmp.eq.s32.totalorder %s19, 0
    %p77 = por %p75, %p76
    %p78 = scmp.ne.s32.totalorder %s66, %s67
    %p79 = scmp.eq.s32.totalorder %s20, 1
    %p80 = por %p78, %p79
    %p82 = scmp.ne.s32.totalorder %s67, %s81
    %p83 = scmp.eq.s32.totalorder %s20, 0
    %p84 = por %p82, %p83
    %s86 = sadd.s32 %s85, 1
    %p89 = scmp.eq.s32.totalorder %s14, 1
    %p90 = scmp.ne.s32.totalorder %s85, %s87
    %p91 = scmp.eq.s32.totalorder %s14, 0
    %p92 = por %p90, %p91
    %p93 = scmp.ne.s32.totalorder %s85, %s87
    %p94 = scmp.eq.s32.totalorder %s19, 1
    %p95 = por %p93, %p94
    %p96 = scmp.ne.s32.totalorder %s87, %s88
    %p97 = scmp.eq.s32.totalorder %s19, 0
    %p98 = por %p96, %p97
    %p99 = scmp.ne.s32.totalorder %s87, %s88
    %p100 = scmp.eq.s32.totalorder %s20, 1
    %p101 = por %p99, %p100
    %p103 = scmp.ne.s32.totalorder %s88, %s102
    %p104 = scmp.eq.s32.totalorder %s20, 0
    %p105 = por %p103, %p104
    %s106 = ssub.s32 %s14, %s21
    %p107 = scmp.eq.s32.totalorder %s106, 0
    %s109 = sadd.s32 %s108, 1
    %s110 = scalar_select %p107, %s108, %s109
    %p113 = pneg %p107
    %p114 = scmp.eq.s32.totalorder %s14, 1
    %p115 = por %p113, %p114
    %p116 = scmp.ne.s32.totalorder %s108, %s111
    %p117 = scmp.eq.s32.totalorder %s14, 0
    %p118 = por %p116, %p117
    %p119 = scmp.ne.s32.totalorder %s108, %s111
    %p120 = scmp.eq.s32.totalorder %s19, 1
    %p121 = por %p119, %p120
    %p122 = scmp.ne.s32.totalorder %s111, %s112
    %p123 = scmp.eq.s32.totalorder %s19, 0
    %p124 = por %p122, %p123
    %p125 = scmp.ne.s32.totalorder %s111, %s112
    %p126 = scmp.eq.s32.totalorder %s20, 1
    %p127 = por %p125, %p126
    %p129 = scmp.ne.s32.totalorder %s112, %s128
    %p130 = scmp.eq.s32.totalorder %s20, 0
    %p131 = por %p129, %p130
    %s132 = ssub.s32 %s14, %s21
    %p133 = scmp.eq.s32.totalorder %s132, 0
    %s135 = sadd.s32 %s134, 1
    %s136 = scalar_select %p133, %s134, %s135
    %p139 = pneg %p133
    %p140 = scmp.eq.s32.totalorder %s14, 1
    %p141 = por %p139, %p140
    %p142 = scmp.ne.s32.totalorder %s134, %s137
    %p143 = scmp.eq.s32.totalorder %s14, 0
    %p144 = por %p142, %p143
    %p145 = scmp.ne.s32.totalorder %s134, %s137
    %p146 = scmp.eq.s32.totalorder %s19, 1
    %p147 = por %p145, %p146
    %p148 = scmp.ne.s32.totalorder %s137, %s138
    %p149 = scmp.eq.s32.totalorder %s19, 0
    %p150 = por %p148, %p149
    %p151 = scmp.ne.s32.totalorder %s137, %s138
    %p152 = scmp.eq.s32.totalorder %s20, 1
    %p153 = por %p151, %p152
    %p155 = scmp.ne.s32.totalorder %s138, %s154
    %p156 = scmp.eq.s32.totalorder %s20, 0
    %p157 = por %p155, %p156
    %s158 = ssub.s32 %s14, %s21
    %p159 = scmp.eq.s32.totalorder %s158, 0
    %s161 = sadd.s32 %s160, 1
    %s162 = scalar_select %p159, %s160, %s161
    %p165 = pneg %p159
    %p166 = scmp.eq.s32.totalorder %s14, 1
    %p167 = por %p165, %p166
    %p168 = scmp.ne.s32.totalorder %s160, %s163
    %p169 = scmp.eq.s32.totalorder %s14, 0
    %p170 = por %p168, %p169
    %p171 = scmp.ne.s32.totalorder %s160, %s163
    %p172 = scmp.eq.s32.totalorder %s19, 1
    %p173 = por %p171, %p172
    %p174 = scmp.ne.s32.totalorder %s163, %s164
    %p175 = scmp.eq.s32.totalorder %s19, 0
    %p176 = por %p174, %p175
    %p177 = scmp.ne.s32.totalorder %s163, %s164
    %p178 = scmp.eq.s32.totalorder %s20, 1
    %p179 = por %p177, %p178
    %p181 = scmp.ne.s32.totalorder %s164, %s180
    %p182 = scmp.eq.s32.totalorder %s20, 0
    %p183 = por %p181, %p182
    %s184 = ssub.s32 %s14, %s21
    %p185 = scmp.eq.s32.totalorder %s184, 0
    %s187 = sadd.s32 %s186, 1
    %s188 = scalar_select %p185, %s186, %s187
    %p191 = pneg %p185
    %p192 = scmp.eq.s32.totalorder %s14, 1
    %p193 = por %p191, %p192
    %p194 = scmp.ne.s32.totalorder %s186, %s189
    %p195 = scmp.eq.s32.totalorder %s14, 0
    %p196 = por %p194, %p195
    %p197 = scmp.ne.s32.totalorder %s186, %s189
    %p198 = scmp.eq.s32.totalorder %s19, 1
    %p199 = por %p197, %p198
    %p200 = scmp.ne.s32.totalorder %s189, %s190
    %p201 = scmp.eq.s32.totalorder %s19, 0
    %p202 = por %p200, %p201
    %p203 = scmp.ne.s32.totalorder %s189, %s190
    %p204 = scmp.eq.s32.totalorder %s20, 1
    %p205 = por %p203, %p204
    %p207 = scmp.ne.s32.totalorder %s190, %s206
    %p208 = scmp.eq.s32.totalorder %s20, 0
    %p209 = por %p207, %p208
    %p210 = scmp.le.s32.totalorder 1, %s14
    %p211 = scmp.lt.s32.totalorder %s14, 3
    %p212 = pnand %p210, %p211
    %p213 = pneg %p212
    // Predicated region
    $region9: #{dual_sep_conv.4} parent=5 // pred_check
      _
    $region10: #{dual_sep_conv.4} parent=5 // pred_check_branch
      %215 = sbr.rel (%p212) target = $region12
    $region11: #{dual_sep_conv.4} parent=5 // pred_region
      %s216 = ssub.s32 %s14, 1
      // Predicated region
      $region13: #{dual_sep_conv.4} parent=11 // pred_check
        %p217 = pneg %p35
      $region14: #{dual_sep_conv.4} parent=11 // pred_check_branch
        %219 = sbr.rel (%p217) target = $region16
      $region15: #{dual_sep_conv.4} parent=11 // pred_region
        _
      $region16: #{dual_sep_conv.4} parent=11 // pred_fallthru
        _
      // Predicated region
      $region17: #{dual_sep_conv.4} parent=11 // pred_check
        %p220 = pneg %p56
      $region18: #{dual_sep_conv.4} parent=11 // pred_check_branch
        %222 = sbr.rel (%p220) target = $region20
      $region19: #{dual_sep_conv.4} parent=11 // pred_region
        _
      $region20: #{dual_sep_conv.4} parent=11 // pred_fallthru
        _
      // Predicated region
      $region21: #{dual_sep_conv.4} parent=11 // pred_check
        %p223 = pneg %p77
      $region22: #{dual_sep_conv.4} parent=11 // pred_check_branch
        %225 = sbr.rel (%p223) target = $region24
      $region23: #{dual_sep_conv.4} parent=11 // pred_region
        _
      $region24: #{dual_sep_conv.4} parent=11 // pred_fallthru
        _
      // Predicated region
      $region25: #{dual_sep_conv.4} parent=11 // pred_check
        %p226 = pneg %p98
      $region26: #{dual_sep_conv.4} parent=11 // pred_check_branch
        %228 = sbr.rel (%p226) target = $region28
      $region27: #{dual_sep_conv.4} parent=11 // pred_region
        _
      $region28: #{dual_sep_conv.4} parent=11 // pred_fallthru
        _
    $region12: #{dual_sep_conv.4} parent=5 // pred_fallthru
      _
    %p229 = scmp.lt.s32.totalorder %s14, 2
    // Predicated region
    $region29: #{dual_sep_conv.4} parent=5 // pred_check
      %p230 = pneg %p229
    $region30: #{dual_sep_conv.4} parent=5 // pred_check_branch
      %232 = sbr.rel (%p230) target = $region32
    $region31: #{dual_sep_conv.4} parent=5 // pred_region
      // Predicated region
      $region33: #{dual_sep_conv.4} parent=31 // pred_check
        %p233 = pneg %p118
      $region34: #{dual_sep_conv.4} parent=31 // pred_check_branch
        %235 = sbr.rel (%p233) target = $region36
      $region35: #{dual_sep_conv.4} parent=31 // pred_region
        %p236 = scmp.lt.s32.totalorder %s14, 1
        %s237 = scalar_select %p236, %s14, 1
        %s238 = smul.addr %s237, 2
        %s239 = smul.addr %s238, 8
        %s240 = scalar_lea.vmem %s4, %s239
      $region36: #{dual_sep_conv.4} parent=31 // pred_fallthru
        _
    $region32: #{dual_sep_conv.4} parent=5 // pred_fallthru
      _
    %p241 = scmp.le.s32.totalorder 1, %s14
    %p242 = scmp.lt.s32.totalorder %s14, 3
    %p243 = pnand %p241, %p242
    %p244 = pneg %p243
    // Predicated region
    $region37: #{dual_sep_conv.4} parent=5 // pred_check
      _
    $region38: #{dual_sep_conv.4} parent=5 // pred_check_branch
      %246 = sbr.rel (%p243) target = $region40
    $region39: #{dual_sep_conv.4} parent=5 // pred_region
      %s247 = ssub.s32 %s14, 1
      %p248 = pneg %p35
      %p249 = pneg %p32
      %p250 = pneg %p56
      %p251 = pneg %p53
      %p252 = pneg %p77
      %p253 = pneg %p74
      %p254 = pneg %p98
      %p255 = pneg %p95
      %p256 = scmp.lt.s32.totalorder %s19, 1
      %s257 = scalar_select %p256, %s19, 1
      %s258 = smul.addr %s257, 2
      %s259 = smul.addr %s258, 8
      %s260 = scalar_lea.vmem %s4, %s259
      %p261 = pneg %p124
      %p262 = pneg %p121
      %p263 = pneg %p150
      %p264 = pneg %p147
      %p265 = scmp.lt.s32.totalorder %s19, 1
      %s266 = scalar_select %p265, %s19, 1
      %s267 = smul.addr %s266, 4
      %s268 = smul.addr %s267, 8
      %s269 = scalar_lea.vmem %s5, %s268
      %p270 = pneg %p176
      %p271 = pneg %p173
      %p272 = scmp.lt.s32.totalorder %s19, 1
      %s273 = scalar_select %p272, %s19, 1
      %s274 = smul.addr %s273, 2
      %s275 = smul.addr %s274, 8
      %s276 = scalar_lea.vmem %s6, %s275
      %p277 = pneg %p202
      %p278 = pneg %p199
      %p279 = scmp.lt.s32.totalorder %s19, 1
      %s280 = scalar_select %p279, %s19, 1
      %s281 = smul.addr %s280, 2
      %s282 = smul.addr %s281, 8
      %s283 = scalar_lea.vmem %s7, %s282
      %p284 = scmp.lt.s32.totalorder %s19, 1
      %s285 = scalar_select %p284, %s19, 1
      %s286 = smul.addr %s285, 2
      %s287 = smul.addr %s286, 8
      %s288 = scalar_lea.vmem %s4, %s287
      %p289 = scmp.lt.s32.totalorder %s19, 1
      %s290 = scalar_select %p289, %s19, 1
      %s291 = smul.addr %s290, 4
      %s292 = smul.addr %s291, 8
      %s293 = scalar_lea.vmem %s5, %s292
      %p294 = scmp.lt.s32.totalorder %s19, 1
      %s295 = scalar_select %p294, %s19, 1
      %s296 = smul.addr %s295, 2
      %s297 = smul.addr %s296, 8
      %s298 = scalar_lea.vmem %s6, %s297
      %p299 = scmp.lt.s32.totalorder %s19, 1
      %s300 = scalar_select %p299, %s19, 1
      %s301 = smul.addr %s300, 2
      %s302 = smul.addr %s301, 8
      %s303 = scalar_lea.vmem %s7, %s302
      %v304 = vld [vmem:[%s288] sm:$0xff]
      %v305 = vld [vmem:[%s288 + $0x8] sm:$0xff]
      %v306 = vld [vmem:[%s0] sm:$0xff]
      %308 = vset.pattern.permute.xlu0 0
      %309 = vperm.xlu0 %308, %v306
      %v310 = vpop.permute.xlu0 %309
      %v312 = vmul.f32 %v304, %v310
      %v313 = vmul.f32 %v305, %v310
      %v314 = vld [vmem:[%s1] sm:$0xff]
      %316 = vset.pattern.permute.xlu0 0
      %317 = vperm.xlu0 %316, %v314
      %v318 = vpop.permute.xlu0 %317
      %v320 = vadd.f32 %v312, %v318
      %v321 = vadd.f32 %v313, %v318
      %v322 = vmax.f32 %v320, 0.0
      %v323 = vmax.f32 %v321, 0.0
      %326 = vrot.lane.b32.xlu0 %v322, 17
      %v327 = vpop.permute.xlu0 %326
      %328 = vrot.lane.b32.xlu0 %v323, 17
      %v329 = vpop.permute.xlu0 %328
      %vm330 = vcmask 138240
      %v331 = vsel %vm330, %v327, %v329
      %v335 = vsel %vm330, 0.0, %v327
      %v336 = vsel %vm330, %v329, 0.0
      %v337 = vlaneseq
      %v338 = vand.u32 %v337, 127
      %v339 = vadd.s32 %v338, 128
      %vm340 = vcmp.lt.s32.totalorder %v338, 0
      %v341 = vsub.s32 0, %v338
      %v342 = vsel %vm340, %v341, %v338
      %v343 = vshrl.u32 %v342, 4
      %v344 = vand.u32 %v342, 15
      %v345 = vsub.s32 0, %v344
      %v346 = vsel %vm340, %v345, %v344
      %vm347 = vcmp.lt.s32.totalorder %v339, 0
      %v348 = vsub.s32 0, %v339
      %v349 = vsel %vm347, %v348, %v339
      %v350 = vshrl.u32 %v349, 4
      %v351 = vand.u32 %v349, 15
      %v352 = vsub.s32 0, %v351
      %v353 = vsel %vm347, %v352, %v351
      %vm354 = vcmp.ne.s32.totalorder %v346, 0
      %vm355 = vcmp.ne.s32.totalorder %v353, 0
      %vm356 = vcmp.lt.s32.totalorder %v346, 0
      %vm357 = vcmp.lt.s32.totalorder %v353, 0
      %vm358 = vmand %vm356, %vm354
      %vm359 = vmand %vm357, %vm355
      %v360 = vadd.s32 %v346, 16
      %v361 = vadd.s32 %v353, 16
      %v362 = vsel %vm358, %v360, %v346
      %v363 = vsel %vm359, %v361, %v353
      %vm364 = vcmp.ge.s32.totalorder %v362, 1
      %vm365 = vcmp.ge.s32.totalorder %v363, 1
      %vm366 = vcmp.lt.s32.totalorder %v362, 15
      %vm367 = vcmp.lt.s32.totalorder %v363, 15
      %v368 = vsel %vm364, 1, 0
      %v369 = vsel %vm365, 1, 0
      %vm370 = vcmp.eq.s32.totalorder %v368, 1
      %vm371 = vcmp.eq.s32.totalorder %v369, 1
      %v372 = vsel %vm370, %v335, 0.0
      %v373 = vsel %vm371, %v331, 0.0
      %v374 = vld [vmem:[%s2] sm:$0xff]
      %376 = vset.pattern.permute.xlu0 0
      %377 = vperm.xlu0 %376, %v374
      %v378 = vpop.permute.xlu0 %377
      %v380 = vmul.f32 %v372, %v378
      %v381 = vmul.f32 %v373, %v378
      %v382 = vadd.f32 %v380, 0.0
      %v383 = vadd.f32 %v381, 0.0
      %384 = vset.pattern.permute.xlu0 1
      %385 = vperm.xlu0 %384, %v374
      %v386 = vpop.permute.xlu0 %385
      %v388 = vmul.f32 %v335, %v386
      %v389 = vmul.f32 %v331, %v386
      %v390 = vmul.f32 %v336, %v386
      %394 = vrot.lane.b32.xlu0 %v388, 127
      %v395 = vpop.permute.xlu0 %394
      %396 = vrot.lane.b32.xlu0 %v389, 127
      %v397 = vpop.permute.xlu0 %396
      %398 = vrot.lane.b32.xlu0 %v390, 127
      %v399 = vpop.permute.xlu0 %398
      %vm400 = vcmask 1039360
      %v401 = vsel %vm400, %v395, %v397
      %v402 = vsel %vm400, %v397, %v399
      %v405 = vadd.f32 %v382, %v401
      %v406 = vadd.f32 %v383, %v402
      %v407 = vsel %vm366, 1, 0
      %v408 = vsel %vm367, 1, 0
      %vm409 = vcmp.eq.s32.totalorder %v407, 1
      %vm410 = vcmp.eq.s32.totalorder %v408, 1
      %413 = vrot.lane.b32.xlu0 %v335, 126
      %v414 = vpop.permute.xlu0 %413
      %415 = vrot.lane.b32.xlu0 %v331, 126
      %v416 = vpop.permute.xlu0 %415
      %417 = vrot.lane.b32.xlu0 %v336, 126
      %v418 = vpop.permute.xlu0 %417
      %vm419 = vcmask 1031168
      %v420 = vsel %vm419, %v414, %v416
      %v421 = vsel %vm419, %v416, %v418
      %v424 = vsel %vm409, %v420, 0.0
      %v425 = vsel %vm410, %v421, 0.0
      %426 = vset.pattern.permute.xlu0 2
      %427 = vperm.xlu0 %426, %v374
      %v428 = vpop.permute.xlu0 %427
      %v430 = vmul.f32 %v424, %v428
      %v431 = vmul.f32 %v425, %v428
      %v432 = vadd.f32 %v405, %v430
      %v433 = vadd.f32 %v406, %v431
      %434 = vrot.lane.b32.xlu0 %v335, 112
      %v435 = vpop.permute.xlu0 %434
      %436 = vrot.lane.b32.xlu0 %v331, 112
      %v437 = vpop.permute.xlu0 %436
      %438 = vrot.lane.b32.xlu0 %v336, 112
      %v439 = vpop.permute.xlu0 %438
      %vm440 = vcmask 916480
      %v441 = vsel %vm440, %v435, %v437
      %v442 = vsel %vm440, %v437, %v439
      %v445 = vsel %vm370, %v441, 0.0
      %v446 = vsel %vm371, %v442, 0.0
      %447 = vset.pattern.permute.xlu0 3
      %448 = vperm.xlu0 %447, %v374
      %v449 = vpop.permute.xlu0 %448
      %v451 = vmul.f32 %v445, %v449
      %v452 = vmul.f32 %v446, %v449
      %v453 = vadd.f32 %v432, %v451
      %v454 = vadd.f32 %v433, %v452
      %455 = vset.pattern.permute.xlu0 4
      %456 = vperm.xlu0 %455, %v374
      %v457 = vpop.permute.xlu0 %456
      %v459 = vmul.f32 %v335, %v457
      %v460 = vmul.f32 %v331, %v457
      %v461 = vmul.f32 %v336, %v457
      %465 = vrot.lane.b32.xlu0 %v459, 111
      %v466 = vpop.permute.xlu0 %465
      %467 = vrot.lane.b32.xlu0 %v460, 111
      %v468 = vpop.permute.xlu0 %467
      %469 = vrot.lane.b32.xlu0 %v461, 111
      %v470 = vpop.permute.xlu0 %469
      %vm471 = vcmask 908288
      %v472 = vsel %vm471, %v466, %v468
      %v473 = vsel %vm471, %v468, %v470
      %v476 = vadd.f32 %v453, %v472
      %v477 = vadd.f32 %v454, %v473
      %478 = vrot.lane.b32.xlu0 %v335, 110
      %v479 = vpop.permute.xlu0 %478
      %480 = vrot.lane.b32.xlu0 %v331, 110
      %v481 = vpop.permute.xlu0 %480
      %482 = vrot.lane.b32.xlu0 %v336, 110
      %v483 = vpop.permute.xlu0 %482
      %vm484 = vcmask 900096
      %v485 = vsel %vm484, %v479, %v481
      %v486 = vsel %vm484, %v481, %v483
      %v489 = vsel %vm409, %v485, 0.0
      %v490 = vsel %vm410, %v486, 0.0
      %491 = vset.pattern.permute.xlu0 5
      %492 = vperm.xlu0 %491, %v374
      %v493 = vpop.permute.xlu0 %492
      %v495 = vmul.f32 %v489, %v493
      %v496 = vmul.f32 %v490, %v493
      %v497 = vadd.f32 %v476, %v495
      %v498 = vadd.f32 %v477, %v496
      %499 = vrot.lane.b32.xlu0 %v335, 96
      %v500 = vpop.permute.xlu0 %499
      %501 = vrot.lane.b32.xlu0 %v331, 96
      %v502 = vpop.permute.xlu0 %501
      %503 = vrot.lane.b32.xlu0 %v336, 96
      %v504 = vpop.permute.xlu0 %503
      %vm505 = vcmask 785408
      %v506 = vsel %vm505, %v500, %v502
      %v507 = vsel %vm505, %v502, %v504
      %v510 = vsel %vm370, %v506, 0.0
      %v511 = vsel %vm371, %v507, 0.0
      %512 = vset.pattern.permute.xlu0 6
      %513 = vperm.xlu0 %512, %v374
      %v514 = vpop.permute.xlu0 %513
      %v516 = vmul.f32 %v510, %v514
      %v517 = vmul.f32 %v511, %v514
      %v518 = vadd.f32 %v497, %v516
      %v519 = vadd.f32 %v498, %v517
      %520 = vset.pattern.permute.xlu0 7
      %521 = vperm.xlu0 %520, %v374
      %v522 = vpop.permute.xlu0 %521
      %v524 = vmul.f32 %v335, %v522
      %v525 = vmul.f32 %v331, %v522
      %v526 = vmul.f32 %v336, %v522
      %530 = vrot.lane.b32.xlu0 %v524, 95
      %v531 = vpop.permute.xlu0 %530
      %532 = vrot.lane.b32.xlu0 %v525, 95
      %v533 = vpop.permute.xlu0 %532
      %534 = vrot.lane.b32.xlu0 %v526, 95
      %v535 = vpop.permute.xlu0 %534
      %vm536 = vcmask 777216
      %v537 = vsel %vm536, %v531, %v533
      %v538 = vsel %vm536, %v533, %v535
      %v541 = vadd.f32 %v518, %v537
      %v542 = vadd.f32 %v519, %v538
      %543 = vrot.lane.b32.xlu0 %v335, 94
      %v544 = vpop.permute.xlu0 %543
      %545 = vrot.lane.b32.xlu0 %v331, 94
      %v546 = vpop.permute.xlu0 %545
      %547 = vrot.lane.b32.xlu0 %v336, 94
      %v548 = vpop.permute.xlu0 %547
      %vm549 = vcmask 769024
      %v550 = vsel %vm549, %v544, %v546
      %v551 = vsel %vm549, %v546, %v548
      %v554 = vsel %vm409, %v550, 0.0
      %v555 = vsel %vm410, %v551, 0.0
      %556 = vset.pattern.permute.xlu0 8
      %557 = vperm.xlu0 %556, %v374
      %v558 = vpop.permute.xlu0 %557
      %v560 = vmul.f32 %v554, %v558
      %v561 = vmul.f32 %v555, %v558
      %v562 = vadd.f32 %v541, %v560
      %v563 = vadd.f32 %v542, %v561
      %v564 = vld [vmem:[%s3] sm:$0xff]
      %v565 = vld [vmem:[%s3 + $0x8] sm:$0xff]
      %vm566 = vcmask 64512
      %v568 = vsel %vm566, %v564, 0
      %v571 = vsel %vm566, %v565, 0
      %573 = vmatprep.subr.mxu0 %v563
      %574 = vmatpush1.msra.mxu0 %v562
      %575 = vmatprep.subr.mxu0 0.0
      %576 = vmatpush1.msra.mxu0 0.0
      %577 = vmatprep.subr.mxu0 0.0
      %578 = vmatpush1.msra.mxu0 0.0
      %579 = vmatprep.subr.mxu0 0.0
      %580 = vmatpush1.msra.mxu0 0.0
      %581 = vmatprep.subr.mxu0 0.0
      %582 = vmatpush1.msra.mxu0 0.0
      %583 = vmatprep.subr.mxu0 0.0
      %584 = vmatpush1.msra.mxu0 0.0
      %585 = vmatprep.subr.mxu0 0.0
      %586 = vmatpush1.msra.mxu0 0.0
      %587 = vmatprep.subr.mxu0 0.0
      %588 = vmatpush1.msra.mxu0 0.0
      %589 = vmatprep.subr.mxu0 0.0
      %590 = vmatpush1.msra.mxu0 0.0
      %591 = vmatprep.subr.mxu0 0.0
      %592 = vmatpush1.msra.mxu0 0.0
      %593 = vmatprep.subr.mxu0 0.0
      %594 = vmatpush1.msra.mxu0 0.0
      %595 = vmatprep.subr.mxu0 0.0
      %596 = vmatpush1.msra.mxu0 0.0
      %597 = vmatprep.subr.mxu0 0.0
      %598 = vmatpush1.msra.mxu0 0.0
      %599 = vmatprep.subr.mxu0 0.0
      %600 = vmatpush1.msra.mxu0 0.0
      %601 = vmatprep.subr.mxu0 0.0
      %602 = vmatpush1.msra.mxu0 0.0
      %603 = vmatprep.subr.mxu0 0.0
      %604 = vmatpush1.msra.mxu0 0.0
      %605 = vmatprep.subr.mxu0 0.0
      %606 = vmatpush1.msra.mxu0 0.0
      %607 = vmatprep.subr.mxu0 0.0
      %608 = vmatpush1.msra.mxu0 0.0
      %609 = vmatprep.subr.mxu0 0.0
      %610 = vmatpush1.msra.mxu0 0.0
      %611 = vmatprep.subr.mxu0 0.0
      %612 = vmatpush1.msra.mxu0 0.0
      %613 = vmatprep.subr.mxu0 0.0
      %614 = vmatpush1.msra.mxu0 0.0
      %615 = vmatprep.subr.mxu0 0.0
      %616 = vmatpush1.msra.mxu0 0.0
      %617 = vmatprep.subr.mxu0 0.0
      %618 = vmatpush1.msra.mxu0 0.0
      %619 = vmatprep.subr.mxu0 0.0
      %620 = vmatpush1.msra.mxu0 0.0
      %621 = vmatprep.subr.mxu0 0.0
      %622 = vmatpush1.msra.mxu0 0.0
      %623 = vmatprep.subr.mxu0 0.0
      %624 = vmatpush1.msra.mxu0 0.0
      %625 = vmatprep.subr.mxu0 0.0
      %626 = vmatpush1.msra.mxu0 0.0
      %627 = vmatprep.subr.mxu0 0.0
      %628 = vmatpush1.msra.mxu0 0.0
      %629 = vmatprep.subr.mxu0 0.0
      %630 = vmatpush1.msra.mxu0 0.0
      %631 = vmatprep.subr.mxu0 0.0
      %632 = vmatpush1.msra.mxu0 0.0
      %633 = vmatprep.subr.mxu0 0.0
      %634 = vmatpush1.msra.mxu0 0.0
      %635 = vmatprep.subr.mxu0 0.0
      %636 = vmatpush1.msra.mxu0 0.0
      %637 = vmatprep.mubr.f32.mxu0 0.0
      %638 = vmatmul.mubr.f32.gmra.mrb[0].mxu0 %v568
      %v639 = vpop.f32.mrb[0].mxu0
      %v640 = vadd.f32 0.0, %v639
      %v641 = vpop.f32.mrb[0].mxu0
      %v642 = vadd.f32 0.0, %v641
      %643 = vmatprep.mubr.f32.mxu0 0.0
      %644 = vmatmul.mubr.f32.gmra.mrb[0].mxu0 %v571
      %v645 = vpop.f32.mrb[0].mxu0
      %v646 = vadd.f32 0.0, %v645
      %v647 = vpop.f32.mrb[0].mxu0
      %v648 = vadd.f32 0.0, %v647
      %649 = vdwg.mxu0
      %650 = vst [vmem:[%s293] sm:$0xff] %v640
      %651 = vst [vmem:[%s293 + $0x8] sm:$0xff] %v642
      %652 = vst [vmem:[%s293 + $0x10] sm:$0xff] %v646
      %653 = vst [vmem:[%s293 + $0x18] sm:$0xff] %v648
      %v654 = vadd.f32 %v640, %v642
      %655 = vadd.xlane.f32.xlu0 %v654
      %v656 = vpop.xlane.xlu0 %655
      %v657 = vadd.f32 %v646, %v648
      %658 = vadd.xlane.f32.xlu0 %v657
      %v659 = vpop.xlane.xlu0 %658
      %vm660 = vcmask 7168
      %661 = vst.msk [vmem:[%s298] sm:$0xff] %vm660, %v656
      %662 = vst.msk [vmem:[%s298 + $0x8] sm:$0xff] %vm660, %v659
      %v663 = vmul.f32 %v640, %v640
      %v664 = vmul.f32 %v642, %v642
      %v665 = vmul.f32 %v646, %v646
      %v666 = vmul.f32 %v648, %v648
      %v667 = vadd.f32 %v663, %v664
      %668 = vadd.xlane.f32.xlu0 %v667
      %v669 = vpop.xlane.xlu0 %668
      %v670 = vadd.f32 %v665, %v666
      %671 = vadd.xlane.f32.xlu0 %v670
      %v672 = vpop.xlane.xlu0 %671
      %673 = vst.msk [vmem:[%s303] sm:$0xff] %vm660, %v669
      %674 = vst.msk [vmem:[%s303 + $0x8] sm:$0xff] %vm660, %v672
      %p675 = scmp.lt.s32.totalorder %s19, 1
      %s676 = scalar_select %p675, %s19, 1
      %s677 = smul.addr %s676, 4
      %s678 = smul.addr %s677, 8
      %s679 = scalar_lea.vmem %s5, %s678
      %p680 = scmp.lt.s32.totalorder %s19, 1
      %s681 = scalar_select %p680, %s19, 1
      %s682 = smul.addr %s681, 2
      %s683 = smul.addr %s682, 8
      %s684 = scalar_lea.vmem %s6, %s683
      %p685 = scmp.lt.s32.totalorder %s19, 1
      %s686 = scalar_select %p685, %s19, 1
      %s687 = smul.addr %s686, 2
      %s688 = smul.addr %s687, 8
      %s689 = scalar_lea.vmem %s7, %s688
      // Predicated region
      $region41: #{dual_sep_conv.4} parent=39 // pred_check
        %p690 = pneg %p147
      $region42: #{dual_sep_conv.4} parent=39 // pred_check_branch
        %692 = sbr.rel (%p690) target = $region44
      $region43: #{dual_sep_conv.4} parent=39 // pred_region
        _
      $region44: #{dual_sep_conv.4} parent=39 // pred_fallthru
        _
      // Predicated region
      $region45: #{dual_sep_conv.4} parent=39 // pred_check
        %p693 = pneg %p173
      $region46: #{dual_sep_conv.4} parent=39 // pred_check_branch
        %695 = sbr.rel (%p693) target = $region48
      $region47: #{dual_sep_conv.4} parent=39 // pred_region
        _
      $region48: #{dual_sep_conv.4} parent=39 // pred_fallthru
        _
      // Predicated region
      $region49: #{dual_sep_conv.4} parent=39 // pred_check
        %p696 = pneg %p199
      $region50: #{dual_sep_conv.4} parent=39 // pred_check_branch
        %698 = sbr.rel (%p696) target = $region52
      $region51: #{dual_sep_conv.4} parent=39 // pred_region
        _
      $region52: #{dual_sep_conv.4} parent=39 // pred_fallthru
        _
    $region40: #{dual_sep_conv.4} parent=5 // pred_fallthru
      _
    %p699 = scmp.le.s32.totalorder 2, %s14
    // Predicated region
    $region53: #{dual_sep_conv.4} parent=5 // pred_check
      %p700 = pneg %p699
    $region54: #{dual_sep_conv.4} parent=5 // pred_check_branch
      %702 = sbr.rel (%p700) target = $region56
    $region55: #{dual_sep_conv.4} parent=5 // pred_region
      %s703 = ssub.s32 %s14, 2
      // Predicated region
      $region57: #{dual_sep_conv.4} parent=55 // pred_check
        %p704 = pneg %p153
      $region58: #{dual_sep_conv.4} parent=55 // pred_check_branch
        %706 = sbr.rel (%p704) target = $region60
      $region59: #{dual_sep_conv.4} parent=55 // pred_region
        %p707 = scmp.lt.s32.totalorder %s20, 1
        %s708 = scalar_select %p707, %s20, 1
        %s709 = smul.addr %s708, 4
        %s710 = smul.addr %s709, 8
        %s711 = scalar_lea.vmem %s5, %s710
      $region60: #{dual_sep_conv.4} parent=55 // pred_fallthru
        _
      // Predicated region
      $region61: #{dual_sep_conv.4} parent=55 // pred_check
        %p712 = pneg %p179
      $region62: #{dual_sep_conv.4} parent=55 // pred_check_branch
        %714 = sbr.rel (%p712) target = $region64
      $region63: #{dual_sep_conv.4} parent=55 // pred_region
        %p715 = scmp.lt.s32.totalorder %s20, 1
        %s716 = scalar_select %p715, %s20, 1
        %s717 = smul.addr %s716, 2
        %s718 = smul.addr %s717, 8
        %s719 = scalar_lea.vmem %s6, %s718
      $region64: #{dual_sep_conv.4} parent=55 // pred_fallthru
        _
      // Predicated region
      $region65: #{dual_sep_conv.4} parent=55 // pred_check
        %p720 = pneg %p205
      $region66: #{dual_sep_conv.4} parent=55 // pred_check_branch
        %722 = sbr.rel (%p720) target = $region68
      $region67: #{dual_sep_conv.4} parent=55 // pred_region
        %p723 = scmp.lt.s32.totalorder %s20, 1
        %s724 = scalar_select %p723, %s20, 1
        %s725 = smul.addr %s724, 2
        %s726 = smul.addr %s725, 8
        %s727 = scalar_lea.vmem %s7, %s726
      $region68: #{dual_sep_conv.4} parent=55 // pred_fallthru
        _
    $region56: #{dual_sep_conv.4} parent=5 // pred_fallthru
      _
  $region6: #{dual_sep_conv.4} parent=0 // loop_footer
    %s18 = sadd.s32 1, %s14
  $region7: #{dual_sep_conv.4} parent=0 // loop_footer_branch
    %13 = sbr.rel target = $region3
  $region8: #{dual_sep_conv.4} parent=0 // loop_exit
    _

</llo_original>
